<compile_context>
chip_gen: v5e
topology: v5e:2x2
jax: 0.10.0
libtpu: 0.0.40
codegen_flags: <defaults>
</compile_context>

<pallas_src>
import jax
import jax.numpy as jnp
from jax.experimental import pallas as pl
from jax.experimental.pallas import tpu as pltpu

# ----------------------------- activation helpers ---------------------------
_SELU_ALPHA = 1.6732632423543772
_SELU_SCALE = 1.0507009873554805


def _selu(x):
    # exp only on the non-positive branch to avoid overflow in the dead lane.
    return _SELU_SCALE * jnp.where(
        x > 0, x, _SELU_ALPHA * (jnp.exp(jnp.minimum(x, 0.0)) - 1.0)
    )


def _round_up(x, m):
    return ((x + m - 1) // m) * m


def _cdiv(a, b):
    return -(-a // b)


# --------------------------- shared compute helpers --------------------------
def _autoencode(x, ew1, ew2, dw1, dw2):
    """codes = SELU(SELU(x@enc_w1)@enc_w2); dec = tanh(SELU(codes@dec_w1)@dec_w2).

    TODO(synk): AlphaDropout is identity in eval mode (p effectively 0); the
    training-mode stateful dropout is not implemented.
    """
    h = _selu(jnp.dot(x, ew1, preferred_element_type=jnp.float32))
    codes = _selu(jnp.dot(h, ew2, preferred_element_type=jnp.float32))
    g = _selu(jnp.dot(codes, dw1, preferred_element_type=jnp.float32))
    dec = jnp.tanh(jnp.dot(g, dw2, preferred_element_type=jnp.float32))
    return codes, dec


# ------------------------------- Pallas kernels -----------------------------
def _autoenc_kernel(x_ref, ew1_ref, ew2_ref, dw1_ref, dw2_ref, codes_ref, dec_ref):
    """Fused encoder+decoder for one row tile; two lane-contiguous outputs."""
    codes, dec = _autoencode(
        x_ref[...], ew1_ref[...], ew2_ref[...], dw1_ref[...], dw2_ref[...]
    )
    codes_ref[...] = codes
    dec_ref[...] = dec
    # TODO(synk): with hid=32/down=16 the SELU/tanh vregs are lane-sparse; a
    # (tile_r,32)->(tile_r/4,128) relayout of the elementwise stages and a bf16
    # cast of x/weights would further cut EUP ops / HBM reads if profiling
    # shows those as the binding slots.


def _head_kernel(ic_ref, emb_ref, opt_ref,
                 sw1_ref, sb1_ref, sw2_ref, sb2_ref,
                 cw1i_ref, cw1e_ref, cw1o_ref, cb1_ref, cw2_ref, cb2_ref,
                 y_ref):
    """scale_out_layer + c_layer in one launch (large-input path).

    Scalar features arrive packed as one (B,8) slab (cols 0..2 = div/log/cnt,
    rest zero) and so_w1 is zero-padded to K=8, so the first Linear is a single
    aligned MXU matmul.  cat([inst, emb_pred, opt_pred]) @ c_w1 is computed as
    split-matmul-sum (no concat).  y is a lane-dense (B,128) slab.
    """
    h = _selu(jnp.dot(ic_ref[...], sw1_ref[...],
                      preferred_element_type=jnp.float32) + sb1_ref[...])
    inst = _selu(jnp.dot(h, sw2_ref[...],
                         preferred_element_type=jnp.float32) + sb2_ref[...])
    z = (jnp.dot(inst, cw1i_ref[...], preferred_element_type=jnp.float32)
         + jnp.dot(emb_ref[...], cw1e_ref[...], preferred_element_type=jnp.float32)
         + jnp.dot(opt_ref[...], cw1o_ref[...], preferred_element_type=jnp.float32)
         + cb1_ref[...])
    z = _selu(z)
    y_ref[...] = _selu(jnp.dot(z, cw2_ref[...],
                               preferred_element_type=jnp.float32) + cb2_ref[...])


def _make_fused_kernel(bsz, n_emb, n_opt, has_opt, down):
    """Whole forward (autoencoder on emb+opt nodes, pooling, scale_out layer,
    c_layer) in ONE grid-less pallas_call for small problem sizes.

    Pooling / flatten are expressed as matmuls with iota-built one-hot matrices
    so no in-kernel reshape, concat or strided access is required:
      emb_pred @ c_w1_emb == sum_g Sel_g @ (emb_codes @ c_w1_emb[g*D:(g+1)*D])
      global_mean_pool(opt_codes) == pool_mat @ opt_codes
    """
    n_emb_rows = bsz * n_emb
    n_opt_rows = bsz * n_opt

    def _head(ic, emb_codes, opt_codes, sw1, sb1, sw2, sb2,
              cw1i, cw1e, cw1o, cb1, cw2, cb2):
        h = _selu(jnp.dot(ic, sw1, preferred_element_type=jnp.float32) + sb1)
        inst = _selu(jnp.dot(h, sw2, preferred_element_type=jnp.float32) + sb2)
        z = jnp.dot(inst, cw1i, preferred_element_type=jnp.float32) + cb1
        rows_b = jax.lax.broadcasted_iota(jnp.int32, (bsz, n_emb_rows), 0)
        cols_i = jax.lax.broadcasted_iota(jnp.int32, (bsz, n_emb_rows), 1)
        for g in range(n_emb):
            pg = jnp.dot(emb_codes, cw1e[g * down:(g + 1) * down, :],
                         preferred_element_type=jnp.float32)            # (Ne, H)
            sel_g = (cols_i == rows_b * n_emb + g).astype(jnp.float32)  # (B, Ne)
            z = z + jnp.dot(sel_g, pg, preferred_element_type=jnp.float32)
        if has_opt:
            rb = jax.lax.broadcasted_iota(jnp.int32, (bsz, n_opt_rows), 0)
            ci = jax.lax.broadcasted_iota(jnp.int32, (bsz, n_opt_rows), 1)
            in_graph = (ci >= rb * n_opt) & (ci < (rb + 1) * n_opt)
            pool = in_graph.astype(jnp.float32) * (1.0 / n_opt)          # (B, No)
            opt_pred = jnp.dot(pool, opt_codes, preferred_element_type=jnp.float32)
            z = z + jnp.dot(opt_pred, cw1o, preferred_element_type=jnp.float32)
        # no-opt case: opt_pred == 0 -> contributes nothing to z
        z = _selu(z)
        return _selu(jnp.dot(z, cw2, preferred_element_type=jnp.float32) + cb2)

    if has_opt:
        def kernel(ic_ref, x_emb_ref, x_opt_ref,
                   ew1_ref, ew2_ref, dw1_ref, dw2_ref,
                   sw1_ref, sb1_ref, sw2_ref, sb2_ref,
                   cw1i_ref, cw1e_ref, cw1o_ref, cb1_ref, cw2_ref, cb2_ref,
                   emb_codes_ref, emb_dec_ref, opt_codes_ref, opt_dec_ref, y_ref):
            ew1, ew2 = ew1_ref[...], ew2_ref[...]
            dw1, dw2 = dw1_ref[...], dw2_ref[...]
            emb_codes, emb_dec = _autoencode(x_emb_ref[...], ew1, ew2, dw1, dw2)
            emb_codes_ref[...] = emb_codes
            emb_dec_ref[...] = emb_dec
            opt_codes, opt_dec = _autoencode(x_opt_ref[...], ew1, ew2, dw1, dw2)
            opt_codes_ref[...] = opt_codes
            opt_dec_ref[...] = opt_dec
            y_ref[...] = _head(ic_ref[...], emb_codes, opt_codes,
                               sw1_ref[...], sb1_ref[...], sw2_ref[...], sb2_ref[...],
                               cw1i_ref[...], cw1e_ref[...], cw1o_ref[...],
                               cb1_ref[...], cw2_ref[...], cb2_ref[...])
    else:
        def kernel(ic_ref, x_emb_ref,
                   ew1_ref, ew2_ref, dw1_ref, dw2_ref,
                   sw1_ref, sb1_ref, sw2_ref, sb2_ref,
                   cw1i_ref, cw1e_ref, cw1o_ref, cb1_ref, cw2_ref, cb2_ref,
                   emb_codes_ref, emb_dec_ref, y_ref):
            ew1, ew2 = ew1_ref[...], ew2_ref[...]
            dw1, dw2 = dw1_ref[...], dw2_ref[...]
            emb_codes, emb_dec = _autoencode(x_emb_ref[...], ew1, ew2, dw1, dw2)
            emb_codes_ref[...] = emb_codes
            emb_dec_ref[...] = emb_dec
            y_ref[...] = _head(ic_ref[...], emb_codes, None,
                               sw1_ref[...], sb1_ref[...], sw2_ref[...], sb2_ref[...],
                               cw1i_ref[...], cw1e_ref[...], cw1o_ref[...],
                               cb1_ref[...], cw2_ref[...], cb2_ref[...])
    return kernel


# ------------------------------ pallas_call wrappers -------------------------
def _run_autoencoder(params, x):
    """Tiled encoder+decoder over node rows (large-input path)."""
    n_rows, enc_dim = x.shape
    hid = params["enc_w1"].shape[1]
    down = params["enc_w2"].shape[1]

    # Tile plan: big tiles (low per-grid-step overhead), >= 2 tiles once there
    # is enough work so the "parallel" axis shards across both TensorCores on
    # dual-TC chips (v7x), and minimal over-padding (< 8 rows per tile).
    max_tile = 4096
    n8 = _round_up(n_rows, 8)
    grid_r = _cdiv(n8, max_tile)
    if grid_r == 1 and n8 >= 1024:
        grid_r = 2
    tile_r = _round_up(_cdiv(n8, grid_r), 8)
    n_pad = tile_r * grid_r
    x_pad = jnp.pad(x, ((0, n_pad - n_rows), (0, 0))) if n_pad != n_rows else x

    # Right-sized VMEM budget (double-buffered tiles + resident weights + slack)
    # instead of a blanket 48 MiB: a few MiB even at tile_r = 4096, leaving
    # plenty of headroom on v7x's 64 MiB per-TC VMEM.
    tile_bytes = 4 * tile_r * (2 * enc_dim + down)
    w_bytes = 4 * 2 * (enc_dim * hid + hid * down)
    vmem_bytes = int(min(64 * 1024 * 1024,
                         max(8 * 1024 * 1024,
                             4 * tile_bytes + 4 * w_bytes + (2 << 20))))

    flops = 4 * n_pad * (enc_dim * hid + hid * down)
    trans = n_pad * (2 * hid + down + enc_dim)
    bytes_acc = 4 * n_pad * (2 * enc_dim + down) + w_bytes

    codes, dec = pl.pallas_call(
        _autoenc_kernel,
        out_shape=(jax.ShapeDtypeStruct((n_pad, down), jnp.float32),
                   jax.ShapeDtypeStruct((n_pad, enc_dim), jnp.float32)),
        grid=(grid_r,),
        in_specs=[
            pl.BlockSpec((tile_r, enc_dim), lambda i: (i, 0)),
            pl.BlockSpec((enc_dim, hid), lambda i: (0, 0)),   # weights resident
            pl.BlockSpec((hid, down), lambda i: (0, 0)),
            pl.BlockSpec((down, hid), lambda i: (0, 0)),
            pl.BlockSpec((hid, enc_dim), lambda i: (0, 0)),
        ],
        out_specs=(pl.BlockSpec((tile_r, down), lambda i: (i, 0)),
                   pl.BlockSpec((tile_r, enc_dim), lambda i: (i, 0))),
        compiler_params=pltpu.CompilerParams(
            dimension_semantics=("parallel",),
            vmem_limit_bytes=vmem_bytes),
        cost_estimate=pl.CostEstimate(
            flops=flops, transcendentals=trans, bytes_accessed=bytes_acc),
    )(x_pad, params["enc_w1"], params["enc_w2"], params["dec_w1"], params["dec_w2"])

    if n_pad != n_rows:
        codes, dec = codes[:n_rows], dec[:n_rows]
    return codes, dec


def _run_head(params, ic, emb_pred, opt_pred):
    bsz = ic.shape[0]
    up = params["so_w2"].shape[0]
    hid = params["so_w2"].shape[1]
    k_emb = emb_pred.shape[1]
    down = opt_pred.shape[1]

    flops = 2 * bsz * (8 * up + up * hid + (hid + k_emb + down) * hid + hid * 128)
    trans = bsz * (up + 2 * hid + 128)
    bytes_acc = 4 * (bsz * (8 + k_emb + down + 128)
                     + 8 * up + up + up * hid + hid
                     + (hid + k_emb + down) * hid + hid + hid * 128 + 128)

    return pl.pallas_call(
        _head_kernel,
        out_shape=jax.ShapeDtypeStruct((bsz, 128), jnp.float32),
        cost_estimate=pl.CostEstimate(flops=flops, transcendentals=trans,
                                      bytes_accessed=bytes_acc),
    )(ic, emb_pred, opt_pred,
      params["so_w1_pad"], params["so_b1"], params["so_w2"], params["so_b2"],
      params["c_w1_inst"], params["c_w1_emb"], params["c_w1_opt"],
      params["c_b1"], params["c_w2_pad"], params["c_b2_pad"])


def _run_fused(params, ic, x_emb, x_opt, n_emb, n_opt):
    bsz = ic.shape[0]
    enc_dim = params["enc_w1"].shape[0]
    down = params["enc_w2"].shape[1]
    has_opt = x_opt is not None and x_opt.shape[0] > 0
    kernel = _make_fused_kernel(bsz, n_emb, n_opt, has_opt, down)

    weights = (params["enc_w1"], params["enc_w2"], params["dec_w1"], params["dec_w2"],
               params["so_w1_pad"], params["so_b1"], params["so_w2"], params["so_b2"],
               params["c_w1_inst"], params["c_w1_emb"], params["c_w1_opt"],
               params["c_b1"], params["c_w2_pad"], params["c_b2_pad"])

    if has_opt:
        out_shape = (
            jax.ShapeDtypeStruct((x_emb.shape[0], down), jnp.float32),
            jax.ShapeDtypeStruct((x_emb.shape[0], enc_dim), jnp.float32),
            jax.ShapeDtypeStruct((x_opt.shape[0], down), jnp.float32),
            jax.ShapeDtypeStruct((x_opt.shape[0], enc_dim), jnp.float32),
            jax.ShapeDtypeStruct((bsz, 128), jnp.float32),
        )
        return pl.pallas_call(kernel, out_shape=out_shape)(ic, x_emb, x_opt, *weights)

    out_shape = (
        jax.ShapeDtypeStruct((x_emb.shape[0], down), jnp.float32),
        jax.ShapeDtypeStruct((x_emb.shape[0], enc_dim), jnp.float32),
        jax.ShapeDtypeStruct((bsz, 128), jnp.float32),
    )
    return pl.pallas_call(kernel, out_shape=out_shape)(ic, x_emb, *weights)


# ------------------------------ parameter setup ------------------------------
def _he_normal(key, fan_in, fan_out):
    # torch.nn.init.kaiming_normal_(mode='fan_in', nonlinearity='selu'):
    # gain = 3/4, std = gain / sqrt(fan_in). Stored as (in, out) for x @ W.
    std = (3.0 / 4.0) / jnp.sqrt(jnp.float32(fan_in))
    return jax.random.normal(key, (fan_in, fan_out), jnp.float32) * std


def init_params(key, encoding_dim, hidden_dim, n_emb_columns):
    down = hidden_dim // 2
    up = hidden_dim * 2
    k_emb = n_emb_columns * down
    c_in = hidden_dim + k_emb + down
    ks = jax.random.split(key, 8)

    so_w1 = _he_normal(ks[0], 3, up)            # (3, 2H), zero-padded to K=8
    c_w1 = _he_normal(ks[6], c_in, hidden_dim)  # (c_in, H), split per segment
    c_w2 = _he_normal(ks[7], hidden_dim, 1)     # (H, 1), lane-padded to 128

    return {
        # scale_out_layer (biased); K padded to 8 for the packed scalar slab
        "so_w1_pad": jnp.pad(so_w1, ((0, 5), (0, 0))),
        "so_b1": jnp.zeros((1, up), jnp.float32),
        "so_w2": _he_normal(ks[1], up, hidden_dim),
        "so_b2": jnp.zeros((1, hidden_dim), jnp.float32),
        # encoder / decoder (no bias)
        "enc_w1": _he_normal(ks[2], encoding_dim, hidden_dim),
        "enc_w2": _he_normal(ks[3], hidden_dim, down),
        "dec_w1": _he_normal(ks[4], down, hidden_dim),
        "dec_w2": _he_normal(ks[5], hidden_dim, encoding_dim),
        # c_layer (biased), first matmul pre-split by concat segment
        "c_w1_inst": c_w1[:hidden_dim, :],
        "c_w1_emb": c_w1[hidden_dim:hidden_dim + k_emb, :],
        "c_w1_opt": c_w1[hidden_dim + k_emb:, :],
        "c_b1": jnp.zeros((1, hidden_dim), jnp.float32),
        # last layer zero-padded to 128 lanes -> lane-dense y output slab
        "c_w2_pad": jnp.pad(c_w2, ((0, 0), (0, 127))),
        "c_b2_pad": jnp.zeros((1, 128), jnp.float32),
    }


# --------------------------------- forward -----------------------------------
def forward(params, batch, *, n_emb_per_graph, n_opt_per_graph, force_split=False):
    bsz = batch["instance_count"].shape[0]
    down = params["enc_w2"].shape[1]

    x_emb = batch["x_emb"]                       # (B * n_emb_per_graph, E)
    x_opt = batch["x_opt"]                       # (B * n_opt_per_graph, E)
    n_emb_rows, n_opt_rows = x_emb.shape[0], x_opt.shape[0]
    has_opt = n_opt_rows > 0

    # TODO(synk): fixed node count per graph is assumed (to_dense_batch ==
    # reshape, global_mean_pool == equal-segment mean); ragged graphs unsupported.
    assert n_emb_rows == bsz * n_emb_per_graph
    assert (not has_opt) or n_opt_rows == bsz * n_opt_per_graph

    # Pack the three (B,1) scalar features into one (B,8) slab (one DMA; one
    # aligned K=8 matmul against the zero-padded so_w1 inside the kernel).
    ic = jnp.concatenate(
        [batch["instance_count_div"], batch["instance_count_log"],
         batch["instance_count"], jnp.zeros((bsz, 5), jnp.float32)], axis=-1)

    use_fused = (not force_split) and bsz <= 128 and (n_emb_rows + n_opt_rows) <= 2048

    if use_fused:
        # Single launch: autoencoder + pooling + head; codes never leave VMEM.
        outs = _run_fused(params, ic, x_emb, x_opt if has_opt else None,
                          n_emb_per_graph, n_opt_per_graph)
        if has_opt:
            emb_codes_raw, x_emb_dec, opt_codes_raw, x_opt_dec, y_slab = outs
        else:
            emb_codes_raw, x_emb_dec, y_slab = outs
            opt_codes_raw, x_opt_dec = None, None
    else:
        # Large-node-count path: tiled autoencoder per node set (no concat of
        # x_emb/x_opt -> no extra HBM copy), then one fused head launch.
        emb_codes_raw, x_emb_dec = _run_autoencoder(params, x_emb)
        emb_pred = emb_codes_raw.reshape(bsz, n_emb_per_graph * down)
        if has_opt:
            opt_codes_raw, x_opt_dec = _run_autoencoder(params, x_opt)
            opt_pred = opt_codes_raw.reshape(bsz, n_opt_per_graph, down).mean(axis=1)
        else:
            opt_codes_raw, x_opt_dec = None, None
            opt_pred = jnp.zeros((bsz, down), jnp.float32)
        y_slab = _run_head(params, ic, emb_pred, opt_pred)

    y_pred = y_slab[:, :1]
    emb_codes = jax.lax.stop_gradient(emb_codes_raw)          # detach().clone()
    opt_codes = (jax.lax.stop_gradient(opt_codes_raw)
                 if opt_codes_raw is not None else None)

    return {
        "y_pred": y_pred,
        "x_emb_dec": x_emb_dec,
        "x_opt_dec": x_opt_dec,
        "emb_codes": emb_codes,
        "opt_codes": opt_codes,
    }


# ----------------------------------- main ------------------------------------
if __name__ == "__main__":
    ENCODING_DIM = 16
    HIDDEN_DIM = 32
    N_EMB_COLUMNS = 4          # len(emb_columns) -> fixed emb nodes per graph
    N_OPT_PER_GRAPH = 3
    BATCH = 2

    key = jax.random.PRNGKey(0)
    kp, k1, k2, k3, k4, k5 = jax.random.split(key, 6)

    params = init_params(kp, ENCODING_DIM, HIDDEN_DIM, N_EMB_COLUMNS)

    batch = {
        "instance_count": jax.random.uniform(k1, (BATCH, 1), jnp.float32, 1.0, 8.0),
        "instance_count_div": jax.random.uniform(k2, (BATCH, 1), jnp.float32, 0.0, 1.0),
        "instance_count_log": jax.random.uniform(k3, (BATCH, 1), jnp.float32, 0.0, 3.0),
        "x_emb": jax.random.normal(k4, (BATCH * N_EMB_COLUMNS, ENCODING_DIM), jnp.float32),
        "x_opt": jax.random.normal(k5, (BATCH * N_OPT_PER_GRAPH, ENCODING_DIM), jnp.float32),
    }

    # Fused single-launch path (used for this small problem size).
    out = forward(params, batch,
                  n_emb_per_graph=N_EMB_COLUMNS, n_opt_per_graph=N_OPT_PER_GRAPH)
    jax.block_until_ready(out["y_pred"])

    # Also exercise the tiled two-kernel (large-input) path and cross-check.
    out_split = forward(params, batch,
                        n_emb_per_graph=N_EMB_COLUMNS, n_opt_per_graph=N_OPT_PER_GRAPH,
                        force_split=True)
    jax.block_until_ready(out_split["y_pred"])

    assert out["y_pred"].shape == (BATCH, 1)
    assert out["x_emb_dec"].shape == (BATCH * N_EMB_COLUMNS, ENCODING_DIM)
    assert out["x_opt_dec"].shape == (BATCH * N_OPT_PER_GRAPH, ENCODING_DIM)
    assert out["emb_codes"].shape == (BATCH * N_EMB_COLUMNS, HIDDEN_DIM // 2)
    assert out["opt_codes"].shape == (BATCH * N_OPT_PER_GRAPH, HIDDEN_DIM // 2)
    for name in ("y_pred", "x_emb_dec", "x_opt_dec", "emb_codes", "opt_codes"):
        a, b = out[name], out_split[name]
        assert a.shape == b.shape, name
        assert bool(jnp.allclose(a, b, rtol=1e-3, atol=1e-3)), name
    print("KERNEL_OK")
</pallas_src>

<mosaic_0001>
module attributes {stable_mosaic.version = 11 : i64} {
  func.func @kernel(%arg0: memref<2x8xf32, #tpu.memory_space<vmem>>, %arg1: memref<8x16xf32, #tpu.memory_space<vmem>>, %arg2: memref<6x16xf32, #tpu.memory_space<vmem>>, %arg3: memref<16x32xf32, #tpu.memory_space<vmem>>, %arg4: memref<32x16xf32, #tpu.memory_space<vmem>>, %arg5: memref<16x32xf32, #tpu.memory_space<vmem>>, %arg6: memref<32x16xf32, #tpu.memory_space<vmem>>, %arg7: memref<8x64xf32, #tpu.memory_space<vmem>>, %arg8: memref<1x64xf32, #tpu.memory_space<vmem>>, %arg9: memref<64x32xf32, #tpu.memory_space<vmem>>, %arg10: memref<1x32xf32, #tpu.memory_space<vmem>>, %arg11: memref<32x32xf32, #tpu.memory_space<vmem>>, %arg12: memref<64x32xf32, #tpu.memory_space<vmem>>, %arg13: memref<16x32xf32, #tpu.memory_space<vmem>>, %arg14: memref<1x32xf32, #tpu.memory_space<vmem>>, %arg15: memref<32x128xf32, #tpu.memory_space<vmem>>, %arg16: memref<1x128xf32, #tpu.memory_space<vmem>>, %arg17: memref<8x16xf32, #tpu.memory_space<vmem>>, %arg18: memref<8x16xf32, #tpu.memory_space<vmem>>, %arg19: memref<6x16xf32, #tpu.memory_space<vmem>>, %arg20: memref<6x16xf32, #tpu.memory_space<vmem>>, %arg21: memref<2x128xf32, #tpu.memory_space<vmem>>) attributes {dimension_semantics = [], scalar_prefetch = 0 : i64, scratch_operands = 0 : i64, tpu.core_type = #tpu.core_type<tc>} {
    %c0 = arith.constant 0 : index
    %c0_0 = arith.constant 0 : index
    %0 = vector.load %arg3[%c0, %c0_0] : memref<16x32xf32, #tpu.memory_space<vmem>>, vector<16x32xf32>
    %c0_1 = arith.constant 0 : index
    %c0_2 = arith.constant 0 : index
    %1 = vector.load %arg4[%c0_1, %c0_2] : memref<32x16xf32, #tpu.memory_space<vmem>>, vector<32x16xf32>
    %c0_3 = arith.constant 0 : index
    %c0_4 = arith.constant 0 : index
    %2 = vector.load %arg5[%c0_3, %c0_4] : memref<16x32xf32, #tpu.memory_space<vmem>>, vector<16x32xf32>
    %c0_5 = arith.constant 0 : index
    %c0_6 = arith.constant 0 : index
    %3 = vector.load %arg6[%c0_5, %c0_6] : memref<32x16xf32, #tpu.memory_space<vmem>>, vector<32x16xf32>
    %c0_7 = arith.constant 0 : index
    %c0_8 = arith.constant 0 : index
    %4 = vector.load %arg1[%c0_7, %c0_8] : memref<8x16xf32, #tpu.memory_space<vmem>>, vector<8x16xf32>
    %cst = arith.constant dense<0.000000e+00> : vector<8x32xf32>
    %5 = tpu.matmul %4, %0, %cst {dimension_numbers = #tpu.dot_dimension_numbers<[1], [0], [0], [1], [0, 0, 1, 1], [], []>} : vector<8x16xf32>, vector<16x32xf32>, vector<8x32xf32> -> vector<8x32xf32>
    %cst_9 = arith.constant 0.000000e+00 : f32
    %6 = vector.broadcast %cst_9 : f32 to vector<8x32xf32>
    %7 = arith.cmpf ogt, %5, %6 : vector<8x32xf32>
    %cst_10 = arith.constant 0.000000e+00 : f32
    %8 = vector.broadcast %cst_10 : f32 to vector<8x32xf32>
    %9 = arith.minimumf %5, %8 : vector<8x32xf32>
    %10 = math.exp %9 : vector<8x32xf32>
    %cst_11 = arith.constant 1.000000e+00 : f32
    %11 = vector.broadcast %cst_11 : f32 to vector<8x32xf32>
    %12 = arith.subf %10, %11 : vector<8x32xf32>
    %cst_12 = arith.constant 1.67326319 : f32
    %13 = vector.broadcast %cst_12 : f32 to vector<8x32xf32>
    %14 = arith.mulf %13, %12 : vector<8x32xf32>
    %15 = arith.select %7, %5, %14 : vector<8x32xi1>, vector<8x32xf32>
    %cst_13 = arith.constant 1.05070102 : f32
    %16 = vector.broadcast %cst_13 : f32 to vector<8x32xf32>
    %17 = arith.mulf %16, %15 : vector<8x32xf32>
    %cst_14 = arith.constant dense<0.000000e+00> : vector<8x16xf32>
    %18 = tpu.matmul %17, %1, %cst_14 {dimension_numbers = #tpu.dot_dimension_numbers<[1], [0], [0], [1], [0, 0, 1, 1], [], []>} : vector<8x32xf32>, vector<32x16xf32>, vector<8x16xf32> -> vector<8x16xf32>
    %cst_15 = arith.constant 0.000000e+00 : f32
    %19 = vector.broadcast %cst_15 : f32 to vector<8x16xf32>
    %20 = arith.cmpf ogt, %18, %19 : vector<8x16xf32>
    %cst_16 = arith.constant 0.000000e+00 : f32
    %21 = vector.broadcast %cst_16 : f32 to vector<8x16xf32>
    %22 = arith.minimumf %18, %21 : vector<8x16xf32>
    %23 = math.exp %22 : vector<8x16xf32>
    %cst_17 = arith.constant 1.000000e+00 : f32
    %24 = vector.broadcast %cst_17 : f32 to vector<8x16xf32>
    %25 = arith.subf %23, %24 : vector<8x16xf32>
    %cst_18 = arith.constant 1.67326319 : f32
    %26 = vector.broadcast %cst_18 : f32 to vector<8x16xf32>
    %27 = arith.mulf %26, %25 : vector<8x16xf32>
    %28 = arith.select %20, %18, %27 : vector<8x16xi1>, vector<8x16xf32>
    %cst_19 = arith.constant 1.05070102 : f32
    %29 = vector.broadcast %cst_19 : f32 to vector<8x16xf32>
    %30 = arith.mulf %29, %28 : vector<8x16xf32>
    %cst_20 = arith.constant dense<0.000000e+00> : vector<8x32xf32>
    %31 = tpu.matmul %30, %2, %cst_20 {dimension_numbers = #tpu.dot_dimension_numbers<[1], [0], [0], [1], [0, 0, 1, 1], [], []>} : vector<8x16xf32>, vector<16x32xf32>, vector<8x32xf32> -> vector<8x32xf32>
    %cst_21 = arith.constant 0.000000e+00 : f32
    %32 = vector.broadcast %cst_21 : f32 to vector<8x32xf32>
    %33 = arith.cmpf ogt, %31, %32 : vector<8x32xf32>
    %cst_22 = arith.constant 0.000000e+00 : f32
    %34 = vector.broadcast %cst_22 : f32 to vector<8x32xf32>
    %35 = arith.minimumf %31, %34 : vector<8x32xf32>
    %36 = math.exp %35 : vector<8x32xf32>
    %cst_23 = arith.constant 1.000000e+00 : f32
    %37 = vector.broadcast %cst_23 : f32 to vector<8x32xf32>
    %38 = arith.subf %36, %37 : vector<8x32xf32>
    %cst_24 = arith.constant 1.67326319 : f32
    %39 = vector.broadcast %cst_24 : f32 to vector<8x32xf32>
    %40 = arith.mulf %39, %38 : vector<8x32xf32>
    %41 = arith.select %33, %31, %40 : vector<8x32xi1>, vector<8x32xf32>
    %cst_25 = arith.constant 1.05070102 : f32
    %42 = vector.broadcast %cst_25 : f32 to vector<8x32xf32>
    %43 = arith.mulf %42, %41 : vector<8x32xf32>
    %cst_26 = arith.constant dense<0.000000e+00> : vector<8x16xf32>
    %44 = tpu.matmul %43, %3, %cst_26 {dimension_numbers = #tpu.dot_dimension_numbers<[1], [0], [0], [1], [0, 0, 1, 1], [], []>} : vector<8x32xf32>, vector<32x16xf32>, vector<8x16xf32> -> vector<8x16xf32>
    %45 = math.tanh %44 : vector<8x16xf32>
    %c0_27 = arith.constant 0 : index
    %c0_28 = arith.constant 0 : index
    %46 = vector.load %arg17[%c0_27, %c0_28] : memref<8x16xf32, #tpu.memory_space<vmem>>, vector<8x16xf32>
    tpu.vector_store %arg17[%c0_27, %c0_28], %30 {strides = array<i32>} : memref<8x16xf32, #tpu.memory_space<vmem>>, vector<8x16xf32>,
    %c0_29 = arith.constant 0 : index
    %c0_30 = arith.constant 0 : index
    %47 = vector.load %arg18[%c0_29, %c0_30] : memref<8x16xf32, #tpu.memory_space<vmem>>, vector<8x16xf32>
    tpu.vector_store %arg18[%c0_29, %c0_30], %45 {strides = array<i32>} : memref<8x16xf32, #tpu.memory_space<vmem>>, vector<8x16xf32>,
    %c0_31 = arith.constant 0 : index
    %c0_32 = arith.constant 0 : index
    %48 = vector.load %arg2[%c0_31, %c0_32] : memref<6x16xf32, #tpu.memory_space<vmem>>, vector<6x16xf32>
    %cst_33 = arith.constant dense<0.000000e+00> : vector<6x32xf32>
    %49 = tpu.matmul %48, %0, %cst_33 {dimension_numbers = #tpu.dot_dimension_numbers<[1], [0], [0], [1], [0, 0, 1, 1], [], []>} : vector<6x16xf32>, vector<16x32xf32>, vector<6x32xf32> -> vector<6x32xf32>
    %cst_34 = arith.constant 0.000000e+00 : f32
    %50 = vector.broadcast %cst_34 : f32 to vector<6x32xf32>
    %51 = arith.cmpf ogt, %49, %50 : vector<6x32xf32>
    %cst_35 = arith.constant 0.000000e+00 : f32
    %52 = vector.broadcast %cst_35 : f32 to vector<6x32xf32>
    %53 = arith.minimumf %49, %52 : vector<6x32xf32>
    %54 = math.exp %53 : vector<6x32xf32>
    %cst_36 = arith.constant 1.000000e+00 : f32
    %55 = vector.broadcast %cst_36 : f32 to vector<6x32xf32>
    %56 = arith.subf %54, %55 : vector<6x32xf32>
    %cst_37 = arith.constant 1.67326319 : f32
    %57 = vector.broadcast %cst_37 : f32 to vector<6x32xf32>
    %58 = arith.mulf %57, %56 : vector<6x32xf32>
    %59 = arith.select %51, %49, %58 : vector<6x32xi1>, vector<6x32xf32>
    %cst_38 = arith.constant 1.05070102 : f32
    %60 = vector.broadcast %cst_38 : f32 to vector<6x32xf32>
    %61 = arith.mulf %60, %59 : vector<6x32xf32>
    %cst_39 = arith.constant dense<0.000000e+00> : vector<6x16xf32>
    %62 = tpu.matmul %61, %1, %cst_39 {dimension_numbers = #tpu.dot_dimension_numbers<[1], [0], [0], [1], [0, 0, 1, 1], [], []>} : vector<6x32xf32>, vector<32x16xf32>, vector<6x16xf32> -> vector<6x16xf32>
    %cst_40 = arith.constant 0.000000e+00 : f32
    %63 = vector.broadcast %cst_40 : f32 to vector<6x16xf32>
    %64 = arith.cmpf ogt, %62, %63 : vector<6x16xf32>
    %cst_41 = arith.constant 0.000000e+00 : f32
    %65 = vector.broadcast %cst_41 : f32 to vector<6x16xf32>
    %66 = arith.minimumf %62, %65 : vector<6x16xf32>
    %67 = math.exp %66 : vector<6x16xf32>
    %cst_42 = arith.constant 1.000000e+00 : f32
    %68 = vector.broadcast %cst_42 : f32 to vector<6x16xf32>
    %69 = arith.subf %67, %68 : vector<6x16xf32>
    %cst_43 = arith.constant 1.67326319 : f32
    %70 = vector.broadcast %cst_43 : f32 to vector<6x16xf32>
    %71 = arith.mulf %70, %69 : vector<6x16xf32>
    %72 = arith.select %64, %62, %71 : vector<6x16xi1>, vector<6x16xf32>
    %cst_44 = arith.constant 1.05070102 : f32
    %73 = vector.broadcast %cst_44 : f32 to vector<6x16xf32>
    %74 = arith.mulf %73, %72 : vector<6x16xf32>
    %cst_45 = arith.constant dense<0.000000e+00> : vector<6x32xf32>
    %75 = tpu.matmul %74, %2, %cst_45 {dimension_numbers = #tpu.dot_dimension_numbers<[1], [0], [0], [1], [0, 0, 1, 1], [], []>} : vector<6x16xf32>, vector<16x32xf32>, vector<6x32xf32> -> vector<6x32xf32>
    %cst_46 = arith.constant 0.000000e+00 : f32
    %76 = vector.broadcast %cst_46 : f32 to vector<6x32xf32>
    %77 = arith.cmpf ogt, %75, %76 : vector<6x32xf32>
    %cst_47 = arith.constant 0.000000e+00 : f32
    %78 = vector.broadcast %cst_47 : f32 to vector<6x32xf32>
    %79 = arith.minimumf %75, %78 : vector<6x32xf32>
    %80 = math.exp %79 : vector<6x32xf32>
    %cst_48 = arith.constant 1.000000e+00 : f32
    %81 = vector.broadcast %cst_48 : f32 to vector<6x32xf32>
    %82 = arith.subf %80, %81 : vector<6x32xf32>
    %cst_49 = arith.constant 1.67326319 : f32
    %83 = vector.broadcast %cst_49 : f32 to vector<6x32xf32>
    %84 = arith.mulf %83, %82 : vector<6x32xf32>
    %85 = arith.select %77, %75, %84 : vector<6x32xi1>, vector<6x32xf32>
    %cst_50 = arith.constant 1.05070102 : f32
    %86 = vector.broadcast %cst_50 : f32 to vector<6x32xf32>
    %87 = arith.mulf %86, %85 : vector<6x32xf32>
    %cst_51 = arith.constant dense<0.000000e+00> : vector<6x16xf32>
    %88 = tpu.matmul %87, %3, %cst_51 {dimension_numbers = #tpu.dot_dimension_numbers<[1], [0], [0], [1], [0, 0, 1, 1], [], []>} : vector<6x32xf32>, vector<32x16xf32>, vector<6x16xf32> -> vector<6x16xf32>
    %89 = math.tanh %88 : vector<6x16xf32>
    %c0_52 = arith.constant 0 : index
    %c0_53 = arith.constant 0 : index
    %90 = vector.load %arg19[%c0_52, %c0_53] : memref<6x16xf32, #tpu.memory_space<vmem>>, vector<6x16xf32>
    tpu.vector_store %arg19[%c0_52, %c0_53], %74 {strides = array<i32>} : memref<6x16xf32, #tpu.memory_space<vmem>>, vector<6x16xf32>,
    %c0_54 = arith.constant 0 : index
    %c0_55 = arith.constant 0 : index
    %91 = vector.load %arg20[%c0_54, %c0_55] : memref<6x16xf32, #tpu.memory_space<vmem>>, vector<6x16xf32>
    tpu.vector_store %arg20[%c0_54, %c0_55], %89 {strides = array<i32>} : memref<6x16xf32, #tpu.memory_space<vmem>>, vector<6x16xf32>,
    %c0_56 = arith.constant 0 : index
    %c0_57 = arith.constant 0 : index
    %92 = vector.load %arg0[%c0_56, %c0_57] : memref<2x8xf32, #tpu.memory_space<vmem>>, vector<2x8xf32>
    %c0_58 = arith.constant 0 : index
    %c0_59 = arith.constant 0 : index
    %93 = vector.load %arg7[%c0_58, %c0_59] : memref<8x64xf32, #tpu.memory_space<vmem>>, vector<8x64xf32>
    %c0_60 = arith.constant 0 : index
    %c0_61 = arith.constant 0 : index
    %94 = vector.load %arg8[%c0_60, %c0_61] : memref<1x64xf32, #tpu.memory_space<vmem>>, vector<1x64xf32>
    %c0_62 = arith.constant 0 : index
    %c0_63 = arith.constant 0 : index
    %95 = vector.load %arg9[%c0_62, %c0_63] : memref<64x32xf32, #tpu.memory_space<vmem>>, vector<64x32xf32>
    %c0_64 = arith.constant 0 : index
    %c0_65 = arith.constant 0 : index
    %96 = vector.load %arg10[%c0_64, %c0_65] : memref<1x32xf32, #tpu.memory_space<vmem>>, vector<1x32xf32>
    %c0_66 = arith.constant 0 : index
    %c0_67 = arith.constant 0 : index
    %97 = vector.load %arg11[%c0_66, %c0_67] : memref<32x32xf32, #tpu.memory_space<vmem>>, vector<32x32xf32>
    %c0_68 = arith.constant 0 : index
    %c0_69 = arith.constant 0 : index
    %98 = vector.load %arg12[%c0_68, %c0_69] : memref<64x32xf32, #tpu.memory_space<vmem>>, vector<64x32xf32>
    %c0_70 = arith.constant 0 : index
    %c0_71 = arith.constant 0 : index
    %99 = vector.load %arg13[%c0_70, %c0_71] : memref<16x32xf32, #tpu.memory_space<vmem>>, vector<16x32xf32>
    %c0_72 = arith.constant 0 : index
    %c0_73 = arith.constant 0 : index
    %100 = vector.load %arg14[%c0_72, %c0_73] : memref<1x32xf32, #tpu.memory_space<vmem>>, vector<1x32xf32>
    %c0_74 = arith.constant 0 : index
    %c0_75 = arith.constant 0 : index
    %101 = vector.load %arg15[%c0_74, %c0_75] : memref<32x128xf32, #tpu.memory_space<vmem>>, vector<32x128xf32>
    %c0_76 = arith.constant 0 : index
    %c0_77 = arith.constant 0 : index
    %102 = vector.load %arg16[%c0_76, %c0_77] : memref<1x128xf32, #tpu.memory_space<vmem>>, vector<1x128xf32>
    %cst_78 = arith.constant dense<0.000000e+00> : vector<2x64xf32>
    %103 = tpu.matmul %92, %93, %cst_78 {dimension_numbers = #tpu.dot_dimension_numbers<[1], [0], [0], [1], [0, 0, 1, 1], [], []>} : vector<2x8xf32>, vector<8x64xf32>, vector<2x64xf32> -> vector<2x64xf32>
    %104 = vector.broadcast %94 : vector<1x64xf32> to vector<2x64xf32>
    %105 = arith.addf %103, %104 : vector<2x64xf32>
    %cst_79 = arith.constant 0.000000e+00 : f32
    %106 = vector.broadcast %cst_79 : f32 to vector<2x64xf32>
    %107 = arith.cmpf ogt, %105, %106 : vector<2x64xf32>
    %cst_80 = arith.constant 0.000000e+00 : f32
    %108 = vector.broadcast %cst_80 : f32 to vector<2x64xf32>
    %109 = arith.minimumf %105, %108 : vector<2x64xf32>
    %110 = math.exp %109 : vector<2x64xf32>
    %cst_81 = arith.constant 1.000000e+00 : f32
    %111 = vector.broadcast %cst_81 : f32 to vector<2x64xf32>
    %112 = arith.subf %110, %111 : vector<2x64xf32>
    %cst_82 = arith.constant 1.67326319 : f32
    %113 = vector.broadcast %cst_82 : f32 to vector<2x64xf32>
    %114 = arith.mulf %113, %112 : vector<2x64xf32>
    %115 = arith.select %107, %105, %114 : vector<2x64xi1>, vector<2x64xf32>
    %cst_83 = arith.constant 1.05070102 : f32
    %116 = vector.broadcast %cst_83 : f32 to vector<2x64xf32>
    %117 = arith.mulf %116, %115 : vector<2x64xf32>
    %cst_84 = arith.constant dense<0.000000e+00> : vector<2x32xf32>
    %118 = tpu.matmul %117, %95, %cst_84 {dimension_numbers = #tpu.dot_dimension_numbers<[1], [0], [0], [1], [0, 0, 1, 1], [], []>} : vector<2x64xf32>, vector<64x32xf32>, vector<2x32xf32> -> vector<2x32xf32>
    %119 = vector.broadcast %96 : vector<1x32xf32> to vector<2x32xf32>
    %120 = arith.addf %118, %119 : vector<2x32xf32>
    %cst_85 = arith.constant 0.000000e+00 : f32
    %121 = vector.broadcast %cst_85 : f32 to vector<2x32xf32>
    %122 = arith.cmpf ogt, %120, %121 : vector<2x32xf32>
    %cst_86 = arith.constant 0.000000e+00 : f32
    %123 = vector.broadcast %cst_86 : f32 to vector<2x32xf32>
    %124 = arith.minimumf %120, %123 : vector<2x32xf32>
    %125 = math.exp %124 : vector<2x32xf32>
    %cst_87 = arith.constant 1.000000e+00 : f32
    %126 = vector.broadcast %cst_87 : f32 to vector<2x32xf32>
    %127 = arith.subf %125, %126 : vector<2x32xf32>
    %cst_88 = arith.constant 1.67326319 : f32
    %128 = vector.broadcast %cst_88 : f32 to vector<2x32xf32>
    %129 = arith.mulf %128, %127 : vector<2x32xf32>
    %130 = arith.select %122, %120, %129 : vector<2x32xi1>, vector<2x32xf32>
    %cst_89 = arith.constant 1.05070102 : f32
    %131 = vector.broadcast %cst_89 : f32 to vector<2x32xf32>
    %132 = arith.mulf %131, %130 : vector<2x32xf32>
    %cst_90 = arith.constant dense<0.000000e+00> : vector<2x32xf32>
    %133 = tpu.matmul %132, %97, %cst_90 {dimension_numbers = #tpu.dot_dimension_numbers<[1], [0], [0], [1], [0, 0, 1, 1], [], []>} : vector<2x32xf32>, vector<32x32xf32>, vector<2x32xf32> -> vector<2x32xf32>
    %134 = vector.broadcast %100 : vector<1x32xf32> to vector<2x32xf32>
    %135 = arith.addf %133, %134 : vector<2x32xf32>
    %136 = tpu.iota {dimensions = array<i32: 0>} : vector<2x8xi32>
    %137 = tpu.iota {dimensions = array<i32: 1>} : vector<2x8xi32>
    %138 = vector.extract_strided_slice %98 {offsets = [0, 0], sizes = [16, 32], strides = [1, 1]} : vector<64x32xf32> to vector<16x32xf32>
    %cst_91 = arith.constant dense<0.000000e+00> : vector<8x32xf32>
    %139 = tpu.matmul %30, %138, %cst_91 {dimension_numbers = #tpu.dot_dimension_numbers<[1], [0], [0], [1], [0, 0, 1, 1], [], []>} : vector<8x16xf32>, vector<16x32xf32>, vector<8x32xf32> -> vector<8x32xf32>
    %c4_i32 = arith.constant 4 : i32
    %140 = vector.broadcast %c4_i32 : i32 to vector<2x8xi32>
    %141 = arith.muli %136, %140 : vector<2x8xi32>
    %c0_i32 = arith.constant 0 : i32
    %142 = vector.broadcast %c0_i32 : i32 to vector<2x8xi32>
    %143 = arith.addi %141, %142 : vector<2x8xi32>
    %144 = arith.cmpi eq, %137, %143 : vector<2x8xi32>
    %145 = arith.extui %144 : vector<2x8xi1> to vector<2x8xi32>
    %146 = arith.sitofp %145 : vector<2x8xi32> to vector<2x8xf32>
    %cst_92 = arith.constant dense<0.000000e+00> : vector<2x32xf32>
    %147 = tpu.matmul %146, %139, %cst_92 {dimension_numbers = #tpu.dot_dimension_numbers<[1], [0], [0], [1], [0, 0, 1, 1], [], []>} : vector<2x8xf32>, vector<8x32xf32>, vector<2x32xf32> -> vector<2x32xf32>
    %148 = arith.addf %135, %147 : vector<2x32xf32>
    %149 = vector.extract_strided_slice %98 {offsets = [16, 0], sizes = [16, 32], strides = [1, 1]} : vector<64x32xf32> to vector<16x32xf32>
    %cst_93 = arith.constant dense<0.000000e+00> : vector<8x32xf32>
    %150 = tpu.matmul %30, %149, %cst_93 {dimension_numbers = #tpu.dot_dimension_numbers<[1], [0], [0], [1], [0, 0, 1, 1], [], []>} : vector<8x16xf32>, vector<16x32xf32>, vector<8x32xf32> -> vector<8x32xf32>
    %c4_i32_94 = arith.constant 4 : i32
    %151 = vector.broadcast %c4_i32_94 : i32 to vector<2x8xi32>
    %152 = arith.muli %136, %151 : vector<2x8xi32>
    %c1_i32 = arith.constant 1 : i32
    %153 = vector.broadcast %c1_i32 : i32 to vector<2x8xi32>
    %154 = arith.addi %152, %153 : vector<2x8xi32>
    %155 = arith.cmpi eq, %137, %154 : vector<2x8xi32>
    %156 = arith.extui %155 : vector<2x8xi1> to vector<2x8xi32>
    %157 = arith.sitofp %156 : vector<2x8xi32> to vector<2x8xf32>
    %cst_95 = arith.constant dense<0.000000e+00> : vector<2x32xf32>
    %158 = tpu.matmul %157, %150, %cst_95 {dimension_numbers = #tpu.dot_dimension_numbers<[1], [0], [0], [1], [0, 0, 1, 1], [], []>} : vector<2x8xf32>, vector<8x32xf32>, vector<2x32xf32> -> vector<2x32xf32>
    %159 = arith.addf %148, %158 : vector<2x32xf32>
    %160 = vector.extract_strided_slice %98 {offsets = [32, 0], sizes = [16, 32], strides = [1, 1]} : vector<64x32xf32> to vector<16x32xf32>
    %cst_96 = arith.constant dense<0.000000e+00> : vector<8x32xf32>
    %161 = tpu.matmul %30, %160, %cst_96 {dimension_numbers = #tpu.dot_dimension_numbers<[1], [0], [0], [1], [0, 0, 1, 1], [], []>} : vector<8x16xf32>, vector<16x32xf32>, vector<8x32xf32> -> vector<8x32xf32>
    %c4_i32_97 = arith.constant 4 : i32
    %162 = vector.broadcast %c4_i32_97 : i32 to vector<2x8xi32>
    %163 = arith.muli %136, %162 : vector<2x8xi32>
    %c2_i32 = arith.constant 2 : i32
    %164 = vector.broadcast %c2_i32 : i32 to vector<2x8xi32>
    %165 = arith.addi %163, %164 : vector<2x8xi32>
    %166 = arith.cmpi eq, %137, %165 : vector<2x8xi32>
    %167 = arith.extui %166 : vector<2x8xi1> to vector<2x8xi32>
    %168 = arith.sitofp %167 : vector<2x8xi32> to vector<2x8xf32>
    %cst_98 = arith.constant dense<0.000000e+00> : vector<2x32xf32>
    %169 = tpu.matmul %168, %161, %cst_98 {dimension_numbers = #tpu.dot_dimension_numbers<[1], [0], [0], [1], [0, 0, 1, 1], [], []>} : vector<2x8xf32>, vector<8x32xf32>, vector<2x32xf32> -> vector<2x32xf32>
    %170 = arith.addf %159, %169 : vector<2x32xf32>
    %171 = vector.extract_strided_slice %98 {offsets = [48, 0], sizes = [16, 32], strides = [1, 1]} : vector<64x32xf32> to vector<16x32xf32>
    %cst_99 = arith.constant dense<0.000000e+00> : vector<8x32xf32>
    %172 = tpu.matmul %30, %171, %cst_99 {dimension_numbers = #tpu.dot_dimension_numbers<[1], [0], [0], [1], [0, 0, 1, 1], [], []>} : vector<8x16xf32>, vector<16x32xf32>, vector<8x32xf32> -> vector<8x32xf32>
    %c4_i32_100 = arith.constant 4 : i32
    %173 = vector.broadcast %c4_i32_100 : i32 to vector<2x8xi32>
    %174 = arith.muli %136, %173 : vector<2x8xi32>
    %c3_i32 = arith.constant 3 : i32
    %175 = vector.broadcast %c3_i32 : i32 to vector<2x8xi32>
    %176 = arith.addi %174, %175 : vector<2x8xi32>
    %177 = arith.cmpi eq, %137, %176 : vector<2x8xi32>
    %178 = arith.extui %177 : vector<2x8xi1> to vector<2x8xi32>
    %179 = arith.sitofp %178 : vector<2x8xi32> to vector<2x8xf32>
    %cst_101 = arith.constant dense<0.000000e+00> : vector<2x32xf32>
    %180 = tpu.matmul %179, %172, %cst_101 {dimension_numbers = #tpu.dot_dimension_numbers<[1], [0], [0], [1], [0, 0, 1, 1], [], []>} : vector<2x8xf32>, vector<8x32xf32>, vector<2x32xf32> -> vector<2x32xf32>
    %181 = arith.addf %170, %180 : vector<2x32xf32>
    %182 = tpu.iota {dimensions = array<i32: 0>} : vector<2x6xi32>
    %183 = tpu.iota {dimensions = array<i32: 1>} : vector<2x6xi32>
    %c3_i32_102 = arith.constant 3 : i32
    %184 = vector.broadcast %c3_i32_102 : i32 to vector<2x6xi32>
    %185 = arith.muli %182, %184 : vector<2x6xi32>
    %186 = arith.cmpi sge, %183, %185 : vector<2x6xi32>
    %c1_i32_103 = arith.constant 1 : i32
    %187 = vector.broadcast %c1_i32_103 : i32 to vector<2x6xi32>
    %188 = arith.addi %182, %187 : vector<2x6xi32>
    %c3_i32_104 = arith.constant 3 : i32
    %189 = vector.broadcast %c3_i32_104 : i32 to vector<2x6xi32>
    %190 = arith.muli %188, %189 : vector<2x6xi32>
    %191 = arith.cmpi slt, %183, %190 : vector<2x6xi32>
    %192 = arith.andi %186, %191 : vector<2x6xi1>
    %193 = arith.extui %192 : vector<2x6xi1> to vector<2x6xi32>
    %194 = arith.sitofp %193 : vector<2x6xi32> to vector<2x6xf32>
    %cst_105 = arith.constant 0.333333343 : f32
    %195 = vector.broadcast %cst_105 : f32 to vector<2x6xf32>
    %196 = arith.mulf %194, %195 : vector<2x6xf32>
    %cst_106 = arith.constant dense<0.000000e+00> : vector<2x16xf32>
    %197 = tpu.matmul %196, %74, %cst_106 {dimension_numbers = #tpu.dot_dimension_numbers<[1], [0], [0], [1], [0, 0, 1, 1], [], []>} : vector<2x6xf32>, vector<6x16xf32>, vector<2x16xf32> -> vector<2x16xf32>
    %cst_107 = arith.constant dense<0.000000e+00> : vector<2x32xf32>
    %198 = tpu.matmul %197, %99, %cst_107 {dimension_numbers = #tpu.dot_dimension_numbers<[1], [0], [0], [1], [0, 0, 1, 1], [], []>} : vector<2x16xf32>, vector<16x32xf32>, vector<2x32xf32> -> vector<2x32xf32>
    %199 = arith.addf %181, %198 : vector<2x32xf32>
    %cst_108 = arith.constant 0.000000e+00 : f32
    %200 = vector.broadcast %cst_108 : f32 to vector<2x32xf32>
    %201 = arith.cmpf ogt, %199, %200 : vector<2x32xf32>
    %cst_109 = arith.constant 0.000000e+00 : f32
    %202 = vector.broadcast %cst_109 : f32 to vector<2x32xf32>
    %203 = arith.minimumf %199, %202 : vector<2x32xf32>
    %204 = math.exp %203 : vector<2x32xf32>
    %cst_110 = arith.constant 1.000000e+00 : f32
    %205 = vector.broadcast %cst_110 : f32 to vector<2x32xf32>
    %206 = arith.subf %204, %205 : vector<2x32xf32>
    %cst_111 = arith.constant 1.67326319 : f32
    %207 = vector.broadcast %cst_111 : f32 to vector<2x32xf32>
    %208 = arith.mulf %207, %206 : vector<2x32xf32>
    %209 = arith.select %201, %199, %208 : vector<2x32xi1>, vector<2x32xf32>
    %cst_112 = arith.constant 1.05070102 : f32
    %210 = vector.broadcast %cst_112 : f32 to vector<2x32xf32>
    %211 = arith.mulf %210, %209 : vector<2x32xf32>
    %cst_113 = arith.constant dense<0.000000e+00> : vector<2x128xf32>
    %212 = tpu.matmul %211, %101, %cst_113 {dimension_numbers = #tpu.dot_dimension_numbers<[1], [0], [0], [1], [0, 0, 1, 1], [], []>} : vector<2x32xf32>, vector<32x128xf32>, vector<2x128xf32> -> vector<2x128xf32>
    %213 = vector.broadcast %102 : vector<1x128xf32> to vector<2x128xf32>
    %214 = arith.addf %212, %213 : vector<2x128xf32>
    %cst_114 = arith.constant 0.000000e+00 : f32
    %215 = vector.broadcast %cst_114 : f32 to vector<2x128xf32>
    %216 = arith.cmpf ogt, %214, %215 : vector<2x128xf32>
    %cst_115 = arith.constant 0.000000e+00 : f32
    %217 = vector.broadcast %cst_115 : f32 to vector<2x128xf32>
    %218 = arith.minimumf %214, %217 : vector<2x128xf32>
    %219 = math.exp %218 : vector<2x128xf32>
    %cst_116 = arith.constant 1.000000e+00 : f32
    %220 = vector.broadcast %cst_116 : f32 to vector<2x128xf32>
    %221 = arith.subf %219, %220 : vector<2x128xf32>
    %cst_117 = arith.constant 1.67326319 : f32
    %222 = vector.broadcast %cst_117 : f32 to vector<2x128xf32>
    %223 = arith.mulf %222, %221 : vector<2x128xf32>
    %224 = arith.select %216, %214, %223 : vector<2x128xi1>, vector<2x128xf32>
    %cst_118 = arith.constant 1.05070102 : f32
    %225 = vector.broadcast %cst_118 : f32 to vector<2x128xf32>
    %226 = arith.mulf %225, %224 : vector<2x128xf32>
    %c0_119 = arith.constant 0 : index
    %c0_120 = arith.constant 0 : index
    %227 = vector.load %arg21[%c0_119, %c0_120] : memref<2x128xf32, #tpu.memory_space<vmem>>, vector<2x128xf32>
    tpu.vector_store %arg21[%c0_119, %c0_120], %226 {strides = array<i32>} : memref<2x128xf32, #tpu.memory_space<vmem>>, vector<2x128xf32>,
    return
  }
}

</mosaic_0001>

<llo_original>
// kernel: tpu_custom_call.1
$region0: #{tpu_custom_call.1}
  #allocation0 [shape = 'u32[]', space=smem, size = 0x4, offset = 0x4, fixed_abs, tag = 'smem constant byte address 0x4 - core index']
  #allocation1 [shape = 'u32[72,128]{1,0:T(1,128)}', space=vmem, size = 0x9000, scoped, tag = 'internal scratch']
  %s0 = inlined_call_operand.vmem [shape: f32[2,8], index: 0, kind: input, shape index: {}]
  %s1 = inlined_call_operand.vmem [shape: f32[8,16], index: 1, kind: input, shape index: {}]
  %s2 = inlined_call_operand.vmem [shape: f32[6,16], index: 2, kind: input, shape index: {}]
  %s3 = inlined_call_operand.vmem [shape: f32[16,32], index: 3, kind: input, shape index: {}]
  %s4 = inlined_call_operand.vmem [shape: f32[32,16], index: 4, kind: input, shape index: {}]
  %s5 = inlined_call_operand.vmem [shape: f32[16,32], index: 5, kind: input, shape index: {}]
  %s6 = inlined_call_operand.vmem [shape: f32[32,16], index: 6, kind: input, shape index: {}]
  %s7 = inlined_call_operand.vmem [shape: f32[8,64], index: 7, kind: input, shape index: {}]
  %s8 = inlined_call_operand.vmem [shape: f32[1,64], index: 8, kind: input, shape index: {}]
  %s9 = inlined_call_operand.vmem [shape: f32[64,32], index: 9, kind: input, shape index: {}]
  %s10 = inlined_call_operand.vmem [shape: f32[1,32], index: 10, kind: input, shape index: {}]
  %s11 = inlined_call_operand.vmem [shape: f32[32,32], index: 11, kind: input, shape index: {}]
  %s12 = inlined_call_operand.vmem [shape: f32[64,32], index: 12, kind: input, shape index: {}]
  %s13 = inlined_call_operand.vmem [shape: f32[16,32], index: 13, kind: input, shape index: {}]
  %s14 = inlined_call_operand.vmem [shape: f32[1,32], index: 14, kind: input, shape index: {}]
  %s15 = inlined_call_operand.vmem [shape: f32[32,128], index: 15, kind: input, shape index: {}]
  %s16 = inlined_call_operand.vmem [shape: f32[1,128], index: 16, kind: input, shape index: {}]
  %s17 = inlined_call_operand.hbm [shape: f32[8,16], index: 17, kind: output, shape index: {0}]
  %s18 = inlined_call_operand.hbm [shape: f32[8,16], index: 18, kind: output, shape index: {1}]
  %s19 = inlined_call_operand.hbm [shape: f32[6,16], index: 19, kind: output, shape index: {2}]
  %s20 = inlined_call_operand.hbm [shape: f32[6,16], index: 20, kind: output, shape index: {3}]
  %s21 = inlined_call_operand.hbm [shape: f32[2,128], index: 21, kind: output, shape index: {4}]
  %22 = xla_tuple %s17, %s18, %s19, %s20, %s21
  %s23 = sld [smem:[#allocation0]]
  $region110: #{tpu_custom_call.1} parent=0
    _
  %s25 = ssub.s32 1, %s23
  %s26 = scalar_select 0, %s25, %s23
  $region1: #{tpu_custom_call.1} parent=0
    #allocation2 [shape = 'u8[4096]{0}', space=vmem, size = 0x1000, scoped, tag = 'output window, operand 0, single buffered']
    #allocation3 [shape = 's32[1]{0}', space=sflag, size = 0x4, scoped, tag = 'scoped memory for tpu_custom_call.1']
    #allocation4 [shape = 'u8[4096]{0}', space=vmem, size = 0x1000, scoped, tag = 'output window, operand 1, single buffered']
    #allocation5 [shape = 's32[1]{0}', space=sflag, size = 0x4, scoped, tag = 'scoped memory for tpu_custom_call.1']
    #allocation6 [shape = 'u8[4096]{0}', space=vmem, size = 0x1000, scoped, tag = 'output window, operand 2, single buffered']
    #allocation7 [shape = 'u8[4096]{0}', space=vmem, size = 0x1000, scoped, tag = 'output window, operand 3, single buffered']
    #allocation8 [shape = 's32[1]{0}', space=sflag, size = 0x4, scoped, tag = 'scoped memory for tpu_custom_call.1']
    #allocation9 [shape = 'u8[1024]{0}', space=vmem, size = 0x400, scoped, tag = 'output window, operand 4, single buffered']
    %27 = vsyncpa [#allocation3], 0
    %28 = vsyncpa [#allocation5], 0
    %29 = vsyncpa [#allocation8], 0
    // Predicated region
    $region2: #{tpu_custom_call.1} parent=1 // pred_check
      _
    $region3: #{tpu_custom_call.1} parent=1 // pred_check_branch
      %31 = sbr.rel (0) target = $region5
    $region4: #{tpu_custom_call.1} parent=1 // pred_region
      _
    $region5: #{tpu_custom_call.1} parent=1 // pred_fallthru
      _
    // Predicated region
    $region6: #{tpu_custom_call.1} parent=1 // pred_check
      _
    $region7: #{tpu_custom_call.1} parent=1 // pred_check_branch
      %33 = sbr.rel (0) target = $region9
    $region8: #{tpu_custom_call.1} parent=1 // pred_region
      _
    $region9: #{tpu_custom_call.1} parent=1 // pred_fallthru
      _
    // Predicated region
    $region10: #{tpu_custom_call.1} parent=1 // pred_check
      _
    $region11: #{tpu_custom_call.1} parent=1 // pred_check_branch
      %35 = sbr.rel (0) target = $region13
    $region12: #{tpu_custom_call.1} parent=1 // pred_region
      _
    $region13: #{tpu_custom_call.1} parent=1 // pred_fallthru
      _
    // Predicated region
    $region14: #{tpu_custom_call.1} parent=1 // pred_check
      _
    $region15: #{tpu_custom_call.1} parent=1 // pred_check_branch
      %37 = sbr.rel (0) target = $region17
    $region16: #{tpu_custom_call.1} parent=1 // pred_region
      _
    $region17: #{tpu_custom_call.1} parent=1 // pred_fallthru
      _
    // Predicated region
    $region18: #{tpu_custom_call.1} parent=1 // pred_check
      _
    $region19: #{tpu_custom_call.1} parent=1 // pred_check_branch
      %39 = sbr.rel (0) target = $region21
    $region20: #{tpu_custom_call.1} parent=1 // pred_region
      _
    $region21: #{tpu_custom_call.1} parent=1 // pred_fallthru
      _
    // Predicated region
    $region22: #{tpu_custom_call.1} parent=1 // pred_check
      _
    $region23: #{tpu_custom_call.1} parent=1 // pred_check_branch
      %41 = sbr.rel (0) target = $region25
    $region24: #{tpu_custom_call.1} parent=1 // pred_region
      _
    $region25: #{tpu_custom_call.1} parent=1 // pred_fallthru
      _
    // Predicated region
    $region26: #{tpu_custom_call.1} parent=1 // pred_check
      _
    $region27: #{tpu_custom_call.1} parent=1 // pred_check_branch
      %43 = sbr.rel (0) target = $region29
    $region28: #{tpu_custom_call.1} parent=1 // pred_region
      _
    $region29: #{tpu_custom_call.1} parent=1 // pred_fallthru
      _
    // Predicated region
    $region30: #{tpu_custom_call.1} parent=1 // pred_check
      _
    $region31: #{tpu_custom_call.1} parent=1 // pred_check_branch
      %45 = sbr.rel (0) target = $region33
    $region32: #{tpu_custom_call.1} parent=1 // pred_region
      _
    $region33: #{tpu_custom_call.1} parent=1 // pred_fallthru
      _
    // Predicated region
    $region34: #{tpu_custom_call.1} parent=1 // pred_check
      _
    $region35: #{tpu_custom_call.1} parent=1 // pred_check_branch
      %47 = sbr.rel (0) target = $region37
    $region36: #{tpu_custom_call.1} parent=1 // pred_region
      _
    $region37: #{tpu_custom_call.1} parent=1 // pred_fallthru
      _
    // Predicated region
    $region38: #{tpu_custom_call.1} parent=1 // pred_check
      _
    $region39: #{tpu_custom_call.1} parent=1 // pred_check_branch
      %49 = sbr.rel (0) target = $region41
    $region40: #{tpu_custom_call.1} parent=1 // pred_region
      _
    $region41: #{tpu_custom_call.1} parent=1 // pred_fallthru
      _
    // Predicated region
    $region42: #{tpu_custom_call.1} parent=1 // pred_check
      _
    $region43: #{tpu_custom_call.1} parent=1 // pred_check_branch
      %51 = sbr.rel (0) target = $region45
    $region44: #{tpu_custom_call.1} parent=1 // pred_region
      _
    $region45: #{tpu_custom_call.1} parent=1 // pred_fallthru
      _
    // Predicated region
    $region46: #{tpu_custom_call.1} parent=1 // pred_check
      _
    $region47: #{tpu_custom_call.1} parent=1 // pred_check_branch
      %53 = sbr.rel (0) target = $region49
    $region48: #{tpu_custom_call.1} parent=1 // pred_region
      _
    $region49: #{tpu_custom_call.1} parent=1 // pred_fallthru
      _
    // Predicated region
    $region50: #{tpu_custom_call.1} parent=1 // pred_check
      _
    $region51: #{tpu_custom_call.1} parent=1 // pred_check_branch
      %55 = sbr.rel (0) target = $region53
    $region52: #{tpu_custom_call.1} parent=1 // pred_region
      _
    $region53: #{tpu_custom_call.1} parent=1 // pred_fallthru
      _
    // Predicated region
    $region54: #{tpu_custom_call.1} parent=1 // pred_check
      _
    $region55: #{tpu_custom_call.1} parent=1 // pred_check_branch
      %57 = sbr.rel (0) target = $region57
    $region56: #{tpu_custom_call.1} parent=1 // pred_region
      _
    $region57: #{tpu_custom_call.1} parent=1 // pred_fallthru
      _
    // Predicated region
    $region58: #{tpu_custom_call.1} parent=1 // pred_check
      _
    $region59: #{tpu_custom_call.1} parent=1 // pred_check_branch
      %59 = sbr.rel (0) target = $region61
    $region60: #{tpu_custom_call.1} parent=1 // pred_region
      _
    $region61: #{tpu_custom_call.1} parent=1 // pred_fallthru
      _
    // Predicated region
    $region62: #{tpu_custom_call.1} parent=1 // pred_check
      _
    $region63: #{tpu_custom_call.1} parent=1 // pred_check_branch
      %61 = sbr.rel (0) target = $region65
    $region64: #{tpu_custom_call.1} parent=1 // pred_region
      _
    $region65: #{tpu_custom_call.1} parent=1 // pred_fallthru
      _
    // Predicated region
    $region66: #{tpu_custom_call.1} parent=1 // pred_check
      _
    $region67: #{tpu_custom_call.1} parent=1 // pred_check_branch
      %63 = sbr.rel (0) target = $region69
    $region68: #{tpu_custom_call.1} parent=1 // pred_region
      _
    $region69: #{tpu_custom_call.1} parent=1 // pred_fallthru
      _
    %v64 = vld [vmem:[%s3] sm:$0xff]
    %v65 = vld [vmem:[%s3 + $0x8] sm:$0xff]
    %v66 = vld [vmem:[%s4] sm:$0xff]
    %v67 = vld [vmem:[%s4 + $0x8] sm:$0xff]
    %v68 = vld [vmem:[%s4 + $0x10] sm:$0xff]
    %v69 = vld [vmem:[%s4 + $0x18] sm:$0xff]
    %v70 = vld [vmem:[%s5] sm:$0xff]
    %v71 = vld [vmem:[%s5 + $0x8] sm:$0xff]
    %v72 = vld [vmem:[%s6] sm:$0xff]
    %v73 = vld [vmem:[%s6 + $0x8] sm:$0xff]
    %v74 = vld [vmem:[%s6 + $0x10] sm:$0xff]
    %v75 = vld [vmem:[%s6 + $0x18] sm:$0xff]
    %v76 = vld [vmem:[%s1] sm:$0xff]
    %vm77 = vcmask 130048
    %v79 = vsel %vm77, %v76, 0
    %81 = vmatpush.msra.mxu0 0.0
    %82 = vmatpush.msra.mxu0 0.0
    %83 = vmatpush.msra.mxu0 0.0
    %84 = vmatpush.msra.mxu0 0.0
    %85 = vmatpush.msra.mxu0 0.0
    %86 = vmatpush.msra.mxu0 0.0
    %87 = vmatpush.msra.mxu0 0.0
    %88 = vmatpush.msra.mxu0 0.0
    %89 = vmatpush.msra.mxu0 0.0
    %90 = vmatpush.msra.mxu0 0.0
    %91 = vmatpush.msra.mxu0 0.0
    %92 = vmatpush.msra.mxu0 0.0
    %93 = vmatpush.msra.mxu0 0.0
    %94 = vmatpush.msra.mxu0 0.0
    %95 = vmatpush.msra.mxu0 %v65
    %96 = vmatpush.msra.mxu0 %v64
    %97 = vmatmul.f32.gmra.mxu0 %v79
    %v98 = vpop.f32.mrf.mxu0
    %v99 = vadd.f32 0.0, %v98
    %100 = vdwg.mxu0
    %vm101 = vcmp.gt.f32.partialorder %v99, 0.0
    %v102 = vmin.f32 %v99, 0.0
    %v103 = vmul.f32 %v102, 1.442695
    %v104 = vpow.pop %v103
    %v105 = vsub.f32 %v104, 1.0
    %v106 = vmul.f32 %v105, 1.6732632
    %v107 = vsel %vm101, %v99, %v106
    %v108 = vmul.f32 %v107, 1.050701
    %vm109 = vcmask 261120
    %v111 = vsel %vm109, %v108, 0
    %113 = vmatpush.msra.mxu0 0.0
    %114 = vmatpush.msra.mxu0 0.0
    %115 = vmatpush.msra.mxu0 0.0
    %116 = vmatpush.msra.mxu0 0.0
    %117 = vmatpush.msra.mxu0 0.0
    %118 = vmatpush.msra.mxu0 0.0
    %119 = vmatpush.msra.mxu0 0.0
    %120 = vmatpush.msra.mxu0 0.0
    %121 = vmatpush.msra.mxu0 0.0
    %122 = vmatpush.msra.mxu0 0.0
    %123 = vmatpush.msra.mxu0 0.0
    %124 = vmatpush.msra.mxu0 0.0
    %125 = vmatpush.msra.mxu0 %v69
    %126 = vmatpush.msra.mxu0 %v68
    %127 = vmatpush.msra.mxu0 %v67
    %128 = vmatpush.msra.mxu0 %v66
    %129 = vmatmul.f32.gmra.mxu0 %v111
    %v130 = vpop.f32.mrf.mxu0
    %v131 = vadd.f32 0.0, %v130
    %132 = vdwg.mxu0
    %vm133 = vcmp.gt.f32.partialorder %v131, 0.0
    %v134 = vmin.f32 %v131, 0.0
    %v135 = vmul.f32 %v134, 1.442695
    %v136 = vpow.pop %v135
    %v137 = vsub.f32 %v136, 1.0
    %v138 = vmul.f32 %v137, 1.6732632
    %v139 = vsel %vm133, %v131, %v138
    %v140 = vmul.f32 %v139, 1.050701
    %v142 = vsel %vm77, %v140, 0
    %144 = vmatpush.msra.mxu0 0.0
    %145 = vmatpush.msra.mxu0 0.0
    %146 = vmatpush.msra.mxu0 0.0
    %147 = vmatpush.msra.mxu0 0.0
    %148 = vmatpush.msra.mxu0 0.0
    %149 = vmatpush.msra.mxu0 0.0
    %150 = vmatpush.msra.mxu0 0.0
    %151 = vmatpush.msra.mxu0 0.0
    %152 = vmatpush.msra.mxu0 0.0
    %153 = vmatpush.msra.mxu0 0.0
    %154 = vmatpush.msra.mxu0 0.0
    %155 = vmatpush.msra.mxu0 0.0
    %156 = vmatpush.msra.mxu0 0.0
    %157 = vmatpush.msra.mxu0 0.0
    %158 = vmatpush.msra.mxu0 %v71
    %159 = vmatpush.msra.mxu0 %v70
    %160 = vmatmul.f32.gmra.mxu0 %v142
    %v161 = vpop.f32.mrf.mxu0
    %v162 = vadd.f32 0.0, %v161
    %163 = vdwg.mxu0
    %vm164 = vcmp.gt.f32.partialorder %v162, 0.0
    %v165 = vmin.f32 %v162, 0.0
    %v166 = vmul.f32 %v165, 1.442695
    %v167 = vpow.pop %v166
    %v168 = vsub.f32 %v167, 1.0
    %v169 = vmul.f32 %v168, 1.6732632
    %v170 = vsel %vm164, %v162, %v169
    %v171 = vmul.f32 %v170, 1.050701
    %v173 = vsel %vm109, %v171, 0
    %175 = vmatpush.msra.mxu0 0.0
    %176 = vmatpush.msra.mxu0 0.0
    %177 = vmatpush.msra.mxu0 0.0
    %178 = vmatpush.msra.mxu0 0.0
    %179 = vmatpush.msra.mxu0 0.0
    %180 = vmatpush.msra.mxu0 0.0
    %181 = vmatpush.msra.mxu0 0.0
    %182 = vmatpush.msra.mxu0 0.0
    %183 = vmatpush.msra.mxu0 0.0
    %184 = vmatpush.msra.mxu0 0.0
    %185 = vmatpush.msra.mxu0 0.0
    %186 = vmatpush.msra.mxu0 0.0
    %187 = vmatpush.msra.mxu0 %v75
    %188 = vmatpush.msra.mxu0 %v74
    %189 = vmatpush.msra.mxu0 %v73
    %190 = vmatpush.msra.mxu0 %v72
    %191 = vmatmul.f32.gmra.mxu0 %v173
    %v192 = vpop.f32.mrf.mxu0
    %v193 = vadd.f32 0.0, %v192
    %194 = vdwg.mxu0
    %v195 = vtanh.pop %v193
    %196 = vst.msk [vmem:[#allocation2] sm:$0xff] %vm77, %v140
    %197 = vst.msk [vmem:[#allocation4] sm:$0xff] %vm77, %v195
    %v198 = vld [vmem:[%s2] sm:$0x3f]
    %v200 = vsel %vm77, %v198, 0
    %202 = vmatpush.msra.mxu0 0.0
    %203 = vmatpush.msra.mxu0 0.0
    %204 = vmatpush.msra.mxu0 0.0
    %205 = vmatpush.msra.mxu0 0.0
    %206 = vmatpush.msra.mxu0 0.0
    %207 = vmatpush.msra.mxu0 0.0
    %208 = vmatpush.msra.mxu0 0.0
    %209 = vmatpush.msra.mxu0 0.0
    %210 = vmatpush.msra.mxu0 0.0
    %211 = vmatpush.msra.mxu0 0.0
    %212 = vmatpush.msra.mxu0 0.0
    %213 = vmatpush.msra.mxu0 0.0
    %214 = vmatpush.msra.mxu0 0.0
    %215 = vmatpush.msra.mxu0 0.0
    %216 = vmatpush.msra.mxu0 %v65
    %217 = vmatpush.msra.mxu0 %v64
    %218 = vmatmul.f32.gmra.mxu0 %v200
    %v219 = vpop.f32.mrf.mxu0
    %v220 = vadd.f32 0.0, %v219
    %221 = vdwg.mxu0
    %vm222 = vcmp.gt.f32.partialorder %v220, 0.0
    %v223 = vmin.f32 %v220, 0.0
    %v224 = vmul.f32 %v223, 1.442695
    %v225 = vpow.pop %v224
    %v226 = vsub.f32 %v225, 1.0
    %v227 = vmul.f32 %v226, 1.6732632
    %v228 = vsel %vm222, %v220, %v227
    %v229 = vmul.f32 %v228, 1.050701
    %v231 = vsel %vm109, %v229, 0
    %233 = vmatpush.msra.mxu0 0.0
    %234 = vmatpush.msra.mxu0 0.0
    %235 = vmatpush.msra.mxu0 0.0
    %236 = vmatpush.msra.mxu0 0.0
    %237 = vmatpush.msra.mxu0 0.0
    %238 = vmatpush.msra.mxu0 0.0
    %239 = vmatpush.msra.mxu0 0.0
    %240 = vmatpush.msra.mxu0 0.0
    %241 = vmatpush.msra.mxu0 0.0
    %242 = vmatpush.msra.mxu0 0.0
    %243 = vmatpush.msra.mxu0 0.0
    %244 = vmatpush.msra.mxu0 0.0
    %245 = vmatpush.msra.mxu0 %v69
    %246 = vmatpush.msra.mxu0 %v68
    %247 = vmatpush.msra.mxu0 %v67
    %248 = vmatpush.msra.mxu0 %v66
    %249 = vmatmul.f32.gmra.mxu0 %v231
    %v250 = vpop.f32.mrf.mxu0
    %v251 = vadd.f32 0.0, %v250
    %252 = vdwg.mxu0
    %vm253 = vcmp.gt.f32.partialorder %v251, 0.0
    %v254 = vmin.f32 %v251, 0.0
    %v255 = vmul.f32 %v254, 1.442695
    %v256 = vpow.pop %v255
    %v257 = vsub.f32 %v256, 1.0
    %v258 = vmul.f32 %v257, 1.6732632
    %v259 = vsel %vm253, %v251, %v258
    %v260 = vmul.f32 %v259, 1.050701
    %v262 = vsel %vm77, %v260, 0
    %264 = vmatpush.msra.mxu0 0.0
    %265 = vmatpush.msra.mxu0 0.0
    %266 = vmatpush.msra.mxu0 0.0
    %267 = vmatpush.msra.mxu0 0.0
    %268 = vmatpush.msra.mxu0 0.0
    %269 = vmatpush.msra.mxu0 0.0
    %270 = vmatpush.msra.mxu0 0.0
    %271 = vmatpush.msra.mxu0 0.0
    %272 = vmatpush.msra.mxu0 0.0
    %273 = vmatpush.msra.mxu0 0.0
    %274 = vmatpush.msra.mxu0 0.0
    %275 = vmatpush.msra.mxu0 0.0
    %276 = vmatpush.msra.mxu0 0.0
    %277 = vmatpush.msra.mxu0 0.0
    %278 = vmatpush.msra.mxu0 %v71
    %279 = vmatpush.msra.mxu0 %v70
    %280 = vmatmul.f32.gmra.mxu0 %v262
    %v281 = vpop.f32.mrf.mxu0
    %v282 = vadd.f32 0.0, %v281
    %283 = vdwg.mxu0
    %vm284 = vcmp.gt.f32.partialorder %v282, 0.0
    %v285 = vmin.f32 %v282, 0.0
    %v286 = vmul.f32 %v285, 1.442695
    %v287 = vpow.pop %v286
    %v288 = vsub.f32 %v287, 1.0
    %v289 = vmul.f32 %v288, 1.6732632
    %v290 = vsel %vm284, %v282, %v289
    %v291 = vmul.f32 %v290, 1.050701
    %v293 = vsel %vm109, %v291, 0
    %295 = vmatpush.msra.mxu0 0.0
    %296 = vmatpush.msra.mxu0 0.0
    %297 = vmatpush.msra.mxu0 0.0
    %298 = vmatpush.msra.mxu0 0.0
    %299 = vmatpush.msra.mxu0 0.0
    %300 = vmatpush.msra.mxu0 0.0
    %301 = vmatpush.msra.mxu0 0.0
    %302 = vmatpush.msra.mxu0 0.0
    %303 = vmatpush.msra.mxu0 0.0
    %304 = vmatpush.msra.mxu0 0.0
    %305 = vmatpush.msra.mxu0 0.0
    %306 = vmatpush.msra.mxu0 0.0
    %307 = vmatpush.msra.mxu0 %v75
    %308 = vmatpush.msra.mxu0 %v74
    %309 = vmatpush.msra.mxu0 %v73
    %310 = vmatpush.msra.mxu0 %v72
    %311 = vmatmul.f32.gmra.mxu0 %v293
    %v312 = vpop.f32.mrf.mxu0
    %v313 = vadd.f32 0.0, %v312
    %314 = vdwg.mxu0
    %v315 = vtanh.pop %v313
    %vm316 = vcmask 128000
    %317 = vst.msk [vmem:[#allocation6] sm:$0x3f] %vm316, %v260
    %318 = vst.msk [vmem:[#allocation7] sm:$0x3f] %vm316, %v315
    %v319 = vld [vmem:[%s0] sm:$0x3]
    %v320 = vld [vmem:[%s7] sm:$0xff]
    %v321 = vld [vmem:[%s8] sm:$0x1]
    %v322 = vld [vmem:[%s9] sm:$0xff]
    %v323 = vld [vmem:[%s9 + $0x8] sm:$0xff]
    %v324 = vld [vmem:[%s9 + $0x10] sm:$0xff]
    %v325 = vld [vmem:[%s9 + $0x18] sm:$0xff]
    %v326 = vld [vmem:[%s9 + $0x20] sm:$0xff]
    %v327 = vld [vmem:[%s9 + $0x28] sm:$0xff]
    %v328 = vld [vmem:[%s9 + $0x30] sm:$0xff]
    %v329 = vld [vmem:[%s9 + $0x38] sm:$0xff]
    %v330 = vld [vmem:[%s10] sm:$0x1]
    %v331 = vld [vmem:[%s11] sm:$0xff]
    %v332 = vld [vmem:[%s11 + $0x8] sm:$0xff]
    %v333 = vld [vmem:[%s11 + $0x10] sm:$0xff]
    %v334 = vld [vmem:[%s11 + $0x18] sm:$0xff]
    %v335 = vld [vmem:[%s12] sm:$0xff]
    %v336 = vld [vmem:[%s12 + $0x8] sm:$0xff]
    %v337 = vld [vmem:[%s12 + $0x10] sm:$0xff]
    %v338 = vld [vmem:[%s12 + $0x18] sm:$0xff]
    %v339 = vld [vmem:[%s12 + $0x20] sm:$0xff]
    %v340 = vld [vmem:[%s12 + $0x28] sm:$0xff]
    %v341 = vld [vmem:[%s12 + $0x30] sm:$0xff]
    %v342 = vld [vmem:[%s12 + $0x38] sm:$0xff]
    %v343 = vld [vmem:[%s13] sm:$0xff]
    %v344 = vld [vmem:[%s13 + $0x8] sm:$0xff]
    %v345 = vld [vmem:[%s14] sm:$0x1]
    %v346 = vld [vmem:[%s15] sm:$0xff]
    %v347 = vld [vmem:[%s15 + $0x8] sm:$0xff]
    %v348 = vld [vmem:[%s15 + $0x10] sm:$0xff]
    %v349 = vld [vmem:[%s15 + $0x18] sm:$0xff]
    %v350 = vld [vmem:[%s16] sm:$0x1]
    %v352 = vperm.slane %v321, 0
    %vm354 = vcmask 64512
    %v356 = vsel %vm354, %v319, 0
    %358 = vmatpush.msra.mxu0 0.0
    %359 = vmatpush.msra.mxu0 0.0
    %360 = vmatpush.msra.mxu0 0.0
    %361 = vmatpush.msra.mxu0 0.0
    %362 = vmatpush.msra.mxu0 0.0
    %363 = vmatpush.msra.mxu0 0.0
    %364 = vmatpush.msra.mxu0 0.0
    %365 = vmatpush.msra.mxu0 0.0
    %366 = vmatpush.msra.mxu0 0.0
    %367 = vmatpush.msra.mxu0 0.0
    %368 = vmatpush.msra.mxu0 0.0
    %369 = vmatpush.msra.mxu0 0.0
    %370 = vmatpush.msra.mxu0 0.0
    %371 = vmatpush.msra.mxu0 0.0
    %372 = vmatpush.msra.mxu0 0.0
    %373 = vmatpush.msra.mxu0 %v320
    %374 = vmatmul.f32.gmra.mxu0 %v356
    %v375 = vpop.f32.mrf.mxu0
    %v376 = vadd.f32 %v352, %v375
    %377 = vdwg.mxu0
    %vm378 = vcmp.gt.f32.partialorder %v376, 0.0
    %v379 = vmin.f32 %v376, 0.0
    %v380 = vmul.f32 %v379, 1.442695
    %v381 = vpow.pop %v380
    %v382 = vsub.f32 %v381, 1.0
    %v383 = vmul.f32 %v382, 1.6732632
    %v384 = vsel %vm378, %v376, %v383
    %v385 = vmul.f32 %v384, 1.050701
    %v387 = vperm.slane %v330, 0
    %vm389 = vcmask 523264
    %v391 = vsel %vm389, %v385, 0
    %393 = vmatpush.msra.mxu0 0.0
    %394 = vmatpush.msra.mxu0 0.0
    %395 = vmatpush.msra.mxu0 0.0
    %396 = vmatpush.msra.mxu0 0.0
    %397 = vmatpush.msra.mxu0 0.0
    %398 = vmatpush.msra.mxu0 0.0
    %399 = vmatpush.msra.mxu0 0.0
    %400 = vmatpush.msra.mxu0 0.0
    %401 = vmatpush.msra.mxu0 %v329
    %402 = vmatpush.msra.mxu0 %v328
    %403 = vmatpush.msra.mxu0 %v327
    %404 = vmatpush.msra.mxu0 %v326
    %405 = vmatpush.msra.mxu0 %v325
    %406 = vmatpush.msra.mxu0 %v324
    %407 = vmatpush.msra.mxu0 %v323
    %408 = vmatpush.msra.mxu0 %v322
    %409 = vmatmul.f32.gmra.mxu0 %v391
    %v410 = vpop.f32.mrf.mxu0
    %v411 = vadd.f32 %v387, %v410
    %412 = vdwg.mxu0
    %vm413 = vcmp.gt.f32.partialorder %v411, 0.0
    %v414 = vmin.f32 %v411, 0.0
    %v415 = vmul.f32 %v414, 1.442695
    %v416 = vpow.pop %v415
    %v417 = vsub.f32 %v416, 1.0
    %v418 = vmul.f32 %v417, 1.6732632
    %v419 = vsel %vm413, %v411, %v418
    %v420 = vmul.f32 %v419, 1.050701
    %v422 = vperm.slane %v345, 0
    %v425 = vsel %vm109, %v420, 0
    %427 = vmatpush.msra.mxu0 0.0
    %428 = vmatpush.msra.mxu0 0.0
    %429 = vmatpush.msra.mxu0 0.0
    %430 = vmatpush.msra.mxu0 0.0
    %431 = vmatpush.msra.mxu0 0.0
    %432 = vmatpush.msra.mxu0 0.0
    %433 = vmatpush.msra.mxu0 0.0
    %434 = vmatpush.msra.mxu0 0.0
    %435 = vmatpush.msra.mxu0 0.0
    %436 = vmatpush.msra.mxu0 0.0
    %437 = vmatpush.msra.mxu0 0.0
    %438 = vmatpush.msra.mxu0 0.0
    %439 = vmatpush.msra.mxu0 %v334
    %440 = vmatpush.msra.mxu0 %v333
    %441 = vmatpush.msra.mxu0 %v332
    %442 = vmatpush.msra.mxu0 %v331
    %443 = vmatmul.f32.gmra.mxu0 %v425
    %v444 = vpop.f32.mrf.mxu0
    %v445 = vadd.f32 %v422, %v444
    %446 = vdwg.mxu0
    %v447 = vlaneseq
    %v448 = vshrl.u32 %v447, 7
    %v449 = vlaneseq
    %v450 = vand.u32 %v449, 127
    %451 = vmatpush.msra.mxu0 0.0
    %452 = vmatpush.msra.mxu0 0.0
    %453 = vmatpush.msra.mxu0 0.0
    %454 = vmatpush.msra.mxu0 0.0
    %455 = vmatpush.msra.mxu0 0.0
    %456 = vmatpush.msra.mxu0 0.0
    %457 = vmatpush.msra.mxu0 0.0
    %458 = vmatpush.msra.mxu0 0.0
    %459 = vmatpush.msra.mxu0 0.0
    %460 = vmatpush.msra.mxu0 0.0
    %461 = vmatpush.msra.mxu0 0.0
    %462 = vmatpush.msra.mxu0 0.0
    %463 = vmatpush.msra.mxu0 0.0
    %464 = vmatpush.msra.mxu0 0.0
    %465 = vmatpush.msra.mxu0 %v336
    %466 = vmatpush.msra.mxu0 %v335
    %467 = vmatmul.f32.gmra.mxu0 %v142
    %v468 = vpop.f32.mrf.mxu0
    %v469 = vadd.f32 0.0, %v468
    %470 = vdwg.mxu0
    %v471 = vmul.u32 %v448, 4
    %vm472 = vcmp.eq.s32.totalorder %v450, %v471
    %v473 = vsel %vm472, 1, 0
    %v474 = vcvt.s32.f32 %v473
    %v476 = vsel %vm354, %v474, 0
    %478 = vmatpush.msra.mxu0 0.0
    %479 = vmatpush.msra.mxu0 0.0
    %480 = vmatpush.msra.mxu0 0.0
    %481 = vmatpush.msra.mxu0 0.0
    %482 = vmatpush.msra.mxu0 0.0
    %483 = vmatpush.msra.mxu0 0.0
    %484 = vmatpush.msra.mxu0 0.0
    %485 = vmatpush.msra.mxu0 0.0
    %486 = vmatpush.msra.mxu0 0.0
    %487 = vmatpush.msra.mxu0 0.0
    %488 = vmatpush.msra.mxu0 0.0
    %489 = vmatpush.msra.mxu0 0.0
    %490 = vmatpush.msra.mxu0 0.0
    %491 = vmatpush.msra.mxu0 0.0
    %492 = vmatpush.msra.mxu0 0.0
    %493 = vmatpush.msra.mxu0 %v469
    %494 = vmatmul.f32.gmra.mxu0 %v476
    %v495 = vpop.f32.mrf.mxu0
    %v496 = vadd.f32 0.0, %v495
    %497 = vdwg.mxu0
    %v498 = vadd.f32 %v445, %v496
    %499 = vmatpush.msra.mxu0 0.0
    %500 = vmatpush.msra.mxu0 0.0
    %501 = vmatpush.msra.mxu0 0.0
    %502 = vmatpush.msra.mxu0 0.0
    %503 = vmatpush.msra.mxu0 0.0
    %504 = vmatpush.msra.mxu0 0.0
    %505 = vmatpush.msra.mxu0 0.0
    %506 = vmatpush.msra.mxu0 0.0
    %507 = vmatpush.msra.mxu0 0.0
    %508 = vmatpush.msra.mxu0 0.0
    %509 = vmatpush.msra.mxu0 0.0
    %510 = vmatpush.msra.mxu0 0.0
    %511 = vmatpush.msra.mxu0 0.0
    %512 = vmatpush.msra.mxu0 0.0
    %513 = vmatpush.msra.mxu0 %v338
    %514 = vmatpush.msra.mxu0 %v337
    %515 = vmatmul.f32.gmra.mxu0 %v142
    %v516 = vpop.f32.mrf.mxu0
    %v517 = vadd.f32 0.0, %v516
    %518 = vdwg.mxu0
    %v519 = vadd.s32 %v471, 1
    %vm520 = vcmp.eq.s32.totalorder %v450, %v519
    %v521 = vsel %vm520, 1, 0
    %v522 = vcvt.s32.f32 %v521
    %v524 = vsel %vm354, %v522, 0
    %526 = vmatpush.msra.mxu0 0.0
    %527 = vmatpush.msra.mxu0 0.0
    %528 = vmatpush.msra.mxu0 0.0
    %529 = vmatpush.msra.mxu0 0.0
    %530 = vmatpush.msra.mxu0 0.0
    %531 = vmatpush.msra.mxu0 0.0
    %532 = vmatpush.msra.mxu0 0.0
    %533 = vmatpush.msra.mxu0 0.0
    %534 = vmatpush.msra.mxu0 0.0
    %535 = vmatpush.msra.mxu0 0.0
    %536 = vmatpush.msra.mxu0 0.0
    %537 = vmatpush.msra.mxu0 0.0
    %538 = vmatpush.msra.mxu0 0.0
    %539 = vmatpush.msra.mxu0 0.0
    %540 = vmatpush.msra.mxu0 0.0
    %541 = vmatpush.msra.mxu0 %v517
    %542 = vmatmul.f32.gmra.mxu0 %v524
    %v543 = vpop.f32.mrf.mxu0
    %v544 = vadd.f32 0.0, %v543
    %545 = vdwg.mxu0
    %v546 = vadd.f32 %v498, %v544
    %547 = vmatpush.msra.mxu0 0.0
    %548 = vmatpush.msra.mxu0 0.0
    %549 = vmatpush.msra.mxu0 0.0
    %550 = vmatpush.msra.mxu0 0.0
    %551 = vmatpush.msra.mxu0 0.0
    %552 = vmatpush.msra.mxu0 0.0
    %553 = vmatpush.msra.mxu0 0.0
    %554 = vmatpush.msra.mxu0 0.0
    %555 = vmatpush.msra.mxu0 0.0
    %556 = vmatpush.msra.mxu0 0.0
    %557 = vmatpush.msra.mxu0 0.0
    %558 = vmatpush.msra.mxu0 0.0
    %559 = vmatpush.msra.mxu0 0.0
    %560 = vmatpush.msra.mxu0 0.0
    %561 = vmatpush.msra.mxu0 %v340
    %562 = vmatpush.msra.mxu0 %v339
    %563 = vmatmul.f32.gmra.mxu0 %v142
    %v564 = vpop.f32.mrf.mxu0
    %v565 = vadd.f32 0.0, %v564
    %566 = vdwg.mxu0
    %v567 = vadd.s32 %v471, 2
    %vm568 = vcmp.eq.s32.totalorder %v450, %v567
    %v569 = vsel %vm568, 1, 0
    %v570 = vcvt.s32.f32 %v569
    %v572 = vsel %vm354, %v570, 0
    %574 = vmatpush.msra.mxu0 0.0
    %575 = vmatpush.msra.mxu0 0.0
    %576 = vmatpush.msra.mxu0 0.0
    %577 = vmatpush.msra.mxu0 0.0
    %578 = vmatpush.msra.mxu0 0.0
    %579 = vmatpush.msra.mxu0 0.0
    %580 = vmatpush.msra.mxu0 0.0
    %581 = vmatpush.msra.mxu0 0.0
    %582 = vmatpush.msra.mxu0 0.0
    %583 = vmatpush.msra.mxu0 0.0
    %584 = vmatpush.msra.mxu0 0.0
    %585 = vmatpush.msra.mxu0 0.0
    %586 = vmatpush.msra.mxu0 0.0
    %587 = vmatpush.msra.mxu0 0.0
    %588 = vmatpush.msra.mxu0 0.0
    %589 = vmatpush.msra.mxu0 %v565
    %590 = vmatmul.f32.gmra.mxu0 %v572
    %v591 = vpop.f32.mrf.mxu0
    %v592 = vadd.f32 0.0, %v591
    %593 = vdwg.mxu0
    %v594 = vadd.f32 %v546, %v592
    %595 = vmatpush.msra.mxu0 0.0
    %596 = vmatpush.msra.mxu0 0.0
    %597 = vmatpush.msra.mxu0 0.0
    %598 = vmatpush.msra.mxu0 0.0
    %599 = vmatpush.msra.mxu0 0.0
    %600 = vmatpush.msra.mxu0 0.0
    %601 = vmatpush.msra.mxu0 0.0
    %602 = vmatpush.msra.mxu0 0.0
    %603 = vmatpush.msra.mxu0 0.0
    %604 = vmatpush.msra.mxu0 0.0
    %605 = vmatpush.msra.mxu0 0.0
    %606 = vmatpush.msra.mxu0 0.0
    %607 = vmatpush.msra.mxu0 0.0
    %608 = vmatpush.msra.mxu0 0.0
    %609 = vmatpush.msra.mxu0 %v342
    %610 = vmatpush.msra.mxu0 %v341
    %611 = vmatmul.f32.gmra.mxu0 %v142
    %v612 = vpop.f32.mrf.mxu0
    %v613 = vadd.f32 0.0, %v612
    %614 = vdwg.mxu0
    %v615 = vadd.s32 %v471, 3
    %vm616 = vcmp.eq.s32.totalorder %v450, %v615
    %v617 = vsel %vm616, 1, 0
    %v618 = vcvt.s32.f32 %v617
    %v620 = vsel %vm354, %v618, 0
    %622 = vmatpush.msra.mxu0 0.0
    %623 = vmatpush.msra.mxu0 0.0
    %624 = vmatpush.msra.mxu0 0.0
    %625 = vmatpush.msra.mxu0 0.0
    %626 = vmatpush.msra.mxu0 0.0
    %627 = vmatpush.msra.mxu0 0.0
    %628 = vmatpush.msra.mxu0 0.0
    %629 = vmatpush.msra.mxu0 0.0
    %630 = vmatpush.msra.mxu0 0.0
    %631 = vmatpush.msra.mxu0 0.0
    %632 = vmatpush.msra.mxu0 0.0
    %633 = vmatpush.msra.mxu0 0.0
    %634 = vmatpush.msra.mxu0 0.0
    %635 = vmatpush.msra.mxu0 0.0
    %636 = vmatpush.msra.mxu0 0.0
    %637 = vmatpush.msra.mxu0 %v613
    %638 = vmatmul.f32.gmra.mxu0 %v620
    %v639 = vpop.f32.mrf.mxu0
    %v640 = vadd.f32 0.0, %v639
    %641 = vdwg.mxu0
    %v642 = vadd.f32 %v594, %v640
    %v643 = vmul.u32 %v448, 3
    %vm644 = vcmp.ge.s32.totalorder %v450, %v643
    %v645 = vadd.s32 %v448, 1
    %v646 = vmul.u32 %v645, 3
    %vm647 = vcmp.lt.s32.totalorder %v450, %v646
    %vm648 = vmand %vm644, %vm647
    %v649 = vsel %vm648, 1, 0
    %v650 = vcvt.s32.f32 %v649
    %v651 = vmul.f32 %v650, 0.33333334
    %vm652 = vcmask 48128
    %v654 = vsel %vm652, %v651, 0
    %vm656 = vcmask 1045504
    %v657 = vsel %vm656, %v260, 0
    %659 = vmatpush.msra.mxu0 0.0
    %660 = vmatpush.msra.mxu0 0.0
    %661 = vmatpush.msra.mxu0 0.0
    %662 = vmatpush.msra.mxu0 0.0
    %663 = vmatpush.msra.mxu0 0.0
    %664 = vmatpush.msra.mxu0 0.0
    %665 = vmatpush.msra.mxu0 0.0
    %666 = vmatpush.msra.mxu0 0.0
    %667 = vmatpush.msra.mxu0 0.0
    %668 = vmatpush.msra.mxu0 0.0
    %669 = vmatpush.msra.mxu0 0.0
    %670 = vmatpush.msra.mxu0 0.0
    %671 = vmatpush.msra.mxu0 0.0
    %672 = vmatpush.msra.mxu0 0.0
    %673 = vmatpush.msra.mxu0 0.0
    %674 = vmatpush.msra.mxu0 %v657
    %675 = vmatmul.f32.gmra.mxu0 %v654
    %v676 = vpop.f32.mrf.mxu0
    %v677 = vadd.f32 0.0, %v676
    %678 = vdwg.mxu0
    %v680 = vsel %vm77, %v677, 0
    %682 = vmatpush.msra.mxu0 0.0
    %683 = vmatpush.msra.mxu0 0.0
    %684 = vmatpush.msra.mxu0 0.0
    %685 = vmatpush.msra.mxu0 0.0
    %686 = vmatpush.msra.mxu0 0.0
    %687 = vmatpush.msra.mxu0 0.0
    %688 = vmatpush.msra.mxu0 0.0
    %689 = vmatpush.msra.mxu0 0.0
    %690 = vmatpush.msra.mxu0 0.0
    %691 = vmatpush.msra.mxu0 0.0
    %692 = vmatpush.msra.mxu0 0.0
    %693 = vmatpush.msra.mxu0 0.0
    %694 = vmatpush.msra.mxu0 0.0
    %695 = vmatpush.msra.mxu0 0.0
    %696 = vmatpush.msra.mxu0 %v344
    %697 = vmatpush.msra.mxu0 %v343
    %698 = vmatmul.f32.gmra.mxu0 %v680
    %v699 = vpop.f32.mrf.mxu0
    %v700 = vadd.f32 0.0, %v699
    %701 = vdwg.mxu0
    %v702 = vadd.f32 %v642, %v700
    %vm703 = vcmp.gt.f32.partialorder %v702, 0.0
    %v704 = vmin.f32 %v702, 0.0
    %v705 = vmul.f32 %v704, 1.442695
    %v706 = vpow.pop %v705
    %v707 = vsub.f32 %v706, 1.0
    %v708 = vmul.f32 %v707, 1.6732632
    %v709 = vsel %vm703, %v702, %v708
    %v710 = vmul.f32 %v709, 1.050701
    %v712 = vperm.slane %v350, 0
    %v715 = vsel %vm109, %v710, 0
    %717 = vmatpush.msra.mxu0 0.0
    %718 = vmatpush.msra.mxu0 0.0
    %719 = vmatpush.msra.mxu0 0.0
    %720 = vmatpush.msra.mxu0 0.0
    %721 = vmatpush.msra.mxu0 0.0
    %722 = vmatpush.msra.mxu0 0.0
    %723 = vmatpush.msra.mxu0 0.0
    %724 = vmatpush.msra.mxu0 0.0
    %725 = vmatpush.msra.mxu0 0.0
    %726 = vmatpush.msra.mxu0 0.0
    %727 = vmatpush.msra.mxu0 0.0
    %728 = vmatpush.msra.mxu0 0.0
    %729 = vmatpush.msra.mxu0 %v349
    %730 = vmatpush.msra.mxu0 %v348
    %731 = vmatpush.msra.mxu0 %v347
    %732 = vmatpush.msra.mxu0 %v346
    %733 = vmatmul.f32.gmra.mxu0 %v715
    %v734 = vpop.f32.mrf.mxu0
    %v735 = vadd.f32 %v712, %v734
    %736 = vdwg.mxu0
    %vm737 = vcmp.gt.f32.partialorder %v735, 0.0
    %v738 = vmin.f32 %v735, 0.0
    %v739 = vmul.f32 %v738, 1.442695
    %v740 = vpow.pop %v739
    %v741 = vsub.f32 %v740, 1.0
    %v742 = vmul.f32 %v741, 1.6732632
    %v743 = vsel %vm737, %v735, %v742
    %v744 = vmul.f32 %v743, 1.050701
    %745 = vst [vmem:[#allocation9] sm:$0x3] %v744
    // Predicated region
    $region70: #{tpu_custom_call.1} parent=1 // pred_check
      _
    $region71: #{tpu_custom_call.1} parent=1 // pred_check_branch
      %747 = sbr.rel (0) target = $region73
    $region72: #{tpu_custom_call.1} parent=1 // pred_region
      %749 = vsyncadd [#allocation3], 0
      %s751 = sshll.u32 [#allocation2], 4
      %s752 = int_to_ptr.vmem [resolvable:$true] %s751
      %s753 = sshll.u32 %s17, 4
      %s754 = int_to_ptr.hbm [resolvable:$true] %s753
      %756 = dma.vmem_to_hbm [thread:$0]  %s752, 128, %s754, [#allocation3]
    $region73: #{tpu_custom_call.1} parent=1 // pred_fallthru
      _
    // Predicated region
    $region74: #{tpu_custom_call.1} parent=1 // pred_check
      _
    $region75: #{tpu_custom_call.1} parent=1 // pred_check_branch
      %758 = sbr.rel (0) target = $region77
    $region76: #{tpu_custom_call.1} parent=1 // pred_region
      %760 = vsyncadd [#allocation5], 0
      %s762 = sshll.u32 [#allocation4], 4
      %s763 = int_to_ptr.vmem [resolvable:$true] %s762
      %s764 = sshll.u32 %s18, 4
      %s765 = int_to_ptr.hbm [resolvable:$true] %s764
      %767 = dma.vmem_to_hbm [thread:$0]  %s763, 128, %s765, [#allocation5]
    $region77: #{tpu_custom_call.1} parent=1 // pred_fallthru
      _
    // Predicated region
    $region78: #{tpu_custom_call.1} parent=1 // pred_check
      _
    $region79: #{tpu_custom_call.1} parent=1 // pred_check_branch
      %769 = sbr.rel (0) target = $region81
    $region80: #{tpu_custom_call.1} parent=1 // pred_region
      %771 = vsyncadd [#allocation5], 0
      %s773 = sshll.u32 [#allocation6], 4
      %s774 = int_to_ptr.vmem [resolvable:$true] %s773
      %s775 = sshll.u32 %s19, 4
      %s776 = int_to_ptr.hbm [resolvable:$true] %s775
      %778 = dma.vmem_to_hbm [thread:$0]  %s774, 128, %s776, [#allocation5]
    $region81: #{tpu_custom_call.1} parent=1 // pred_fallthru
      _
    // Predicated region
    $region82: #{tpu_custom_call.1} parent=1 // pred_check
      _
    $region83: #{tpu_custom_call.1} parent=1 // pred_check_branch
      %780 = sbr.rel (0) target = $region85
    $region84: #{tpu_custom_call.1} parent=1 // pred_region
      %782 = vsyncadd [#allocation8], 0
      %s784 = sshll.u32 [#allocation7], 4
      %s785 = int_to_ptr.vmem [resolvable:$true] %s784
      %s786 = sshll.u32 %s20, 4
      %s787 = int_to_ptr.hbm [resolvable:$true] %s786
      %789 = dma.vmem_to_hbm [thread:$0]  %s785, 128, %s787, [#allocation8]
    $region85: #{tpu_custom_call.1} parent=1 // pred_fallthru
      _
    // Predicated region
    $region86: #{tpu_custom_call.1} parent=1 // pred_check
      _
    $region87: #{tpu_custom_call.1} parent=1 // pred_check_branch
      %791 = sbr.rel (0) target = $region89
    $region88: #{tpu_custom_call.1} parent=1 // pred_region
      %793 = vsyncadd [#allocation8], 0
      %s795 = sshll.u32 [#allocation9], 4
      %s796 = int_to_ptr.vmem [resolvable:$true] %s795
      %s797 = sshll.u32 %s21, 4
      %s798 = int_to_ptr.hbm [resolvable:$true] %s797
      %800 = dma.vmem_to_hbm [thread:$0]  %s796, 32, %s798, [#allocation8]
    $region89: #{tpu_custom_call.1} parent=1 // pred_fallthru
      _
    // Predicated region
    $region90: #{tpu_custom_call.1} parent=1 // pred_check
      _
    $region91: #{tpu_custom_call.1} parent=1 // pred_check_branch
      %802 = sbr.rel (0) target = $region93
    $region92: #{tpu_custom_call.1} parent=1 // pred_region
      %804 = dma.done [#allocation3], 128
    $region93: #{tpu_custom_call.1} parent=1 // pred_fallthru
      _
    // Predicated region
    $region94: #{tpu_custom_call.1} parent=1 // pred_check
      _
    $region95: #{tpu_custom_call.1} parent=1 // pred_check_branch
      %806 = sbr.rel (0) target = $region97
    $region96: #{tpu_custom_call.1} parent=1 // pred_region
      %808 = dma.done [#allocation5], 128
    $region97: #{tpu_custom_call.1} parent=1 // pred_fallthru
      _
    // Predicated region
    $region98: #{tpu_custom_call.1} parent=1 // pred_check
      _
    $region99: #{tpu_custom_call.1} parent=1 // pred_check_branch
      %810 = sbr.rel (0) target = $region101
    $region100: #{tpu_custom_call.1} parent=1 // pred_region
      %812 = dma.done [#allocation5], 128
    $region101: #{tpu_custom_call.1} parent=1 // pred_fallthru
      _
    // Predicated region
    $region102: #{tpu_custom_call.1} parent=1 // pred_check
      _
    $region103: #{tpu_custom_call.1} parent=1 // pred_check_branch
      %814 = sbr.rel (0) target = $region105
    $region104: #{tpu_custom_call.1} parent=1 // pred_region
      %816 = dma.done [#allocation8], 128
    $region105: #{tpu_custom_call.1} parent=1 // pred_fallthru
      _
    // Predicated region
    $region106: #{tpu_custom_call.1} parent=1 // pred_check
      _
    $region107: #{tpu_custom_call.1} parent=1 // pred_check_branch
      %818 = sbr.rel (0) target = $region109
    $region108: #{tpu_custom_call.1} parent=1 // pred_region
      %820 = dma.done [#allocation8], 32
    $region109: #{tpu_custom_call.1} parent=1 // pred_fallthru
      _
    %821 = vsyncpa [#allocation3], 1
    %822 = vsyncpa [#allocation5], 1
    %823 = vsyncpa [#allocation8], 1

</llo_original>
